<compile_context>
chip_gen: v5e
topology: v5e:2x2
jax: 0.10.0
libtpu: 0.0.40
codegen_flags: <defaults>
</compile_context>

<pallas_src>
import jax
import jax.numpy as jnp
from jax.experimental import pallas as pl
from jax.experimental.pallas import tpu as pltpu


def bert_embeddings_kernel(ids_ref,                                   # SMEM (scalar prefetch)
                           word_hbm, seg_ids_ref, pos_ref, seg_tbl_ref,
                           gamma_ref, beta_ref,                       # inputs
                           out_ref,                                   # output (1, T, D)
                           wrow_buf, dma_sems):                       # scratch
    b = pl.program_id(0)
    s = pl.program_id(1)
    tile_s, d = wrow_buf.shape
    base = s * tile_s

    # ---- issue one row-gather DMA per token (word table stays in HBM) ------
    copies = []
    for r in range(tile_s):
        tok = ids_ref[b, base + r]                                    # scalar SMEM read
        cp = pltpu.make_async_copy(word_hbm.at[pl.ds(tok, 1), :],
                                   wrow_buf.at[pl.ds(r, 1), :],
                                   dma_sems.at[r])
        cp.start()
        copies.append(cp)

    # ---- position embedding: already the right rows via BlockSpec ----------
    pos_emb = pos_ref[...].astype(jnp.float32)                        # (T, D)

    # ---- segment embedding: mask-select over the tiny table (VPU only) -----
    seg_vals = seg_ids_ref[0]                                         # (T, 1) int32
    seg_tbl = seg_tbl_ref[...].astype(jnp.float32)                    # (G, D)
    num_seg = seg_tbl_ref.shape[0]
    seg_emb = jnp.zeros_like(pos_emb)                                 # (T, D)
    for g in range(num_seg):                                          # G is tiny (e.g. 2)
        m = (seg_vals == g).astype(jnp.float32)                       # (T, 1)
        seg_emb = seg_emb + m * seg_tbl[g:g + 1, :]                   # broadcast (1, D)

    # ---- wait for the gathered word rows ------------------------------------
    for cp in copies:
        cp.wait()
    word_emb = wrow_buf[...].astype(jnp.float32)                      # (T, D)

    x = word_emb + pos_emb + seg_emb

    # ---- LayerNorm over D (biased variance, eps=1e-5), f32 math -------------
    mean = jnp.mean(x, axis=-1, keepdims=True)
    xc = x - mean
    var = jnp.mean(xc * xc, axis=-1, keepdims=True)
    inv_std = jax.lax.rsqrt(var + 1e-5)
    y = xc * inv_std * gamma_ref[...] + beta_ref[...]

    # Dropout in eval mode is identity.
    out_ref[...] = y[None, :, :].astype(out_ref.dtype)


def bert_embeddings(input_ids, params, position_ids=None, segment_ids=None, *, tile_s=8):
    B, S = input_ids.shape
    word_tbl = params['word_table']            # (V, D)
    pos_tbl = params['pos_table']              # (max_seq, D)
    seg_tbl = params['seg_table']              # (num_seg, D)
    D = word_tbl.shape[1]
    G = seg_tbl.shape[0]
    gamma = params['gamma'].reshape(1, D).astype(jnp.float32)
    beta = params['beta'].reshape(1, D).astype(jnp.float32)

    # Positional rows for this sequence (default position_ids == arange(S)).
    if position_ids is None:
        pos_rows = pos_tbl[:S]
    else:
        pos_rows = pos_tbl[jnp.asarray(position_ids, jnp.int32).reshape(-1)[:S]]
    if segment_ids is None:
        segment_ids = jnp.zeros((B, S), dtype=jnp.int32)

    # Pad the sequence to a multiple of the token tile (pad tokens index row 0).
    n_tiles = pl.cdiv(S, tile_s)
    S_pad = n_tiles * tile_s
    pad = S_pad - S
    ids_p = jnp.pad(input_ids.astype(jnp.int32), ((0, 0), (0, pad)))
    seg_p = jnp.pad(segment_ids.astype(jnp.int32), ((0, 0), (0, pad)))[..., None]   # (B, S_pad, 1)
    pos_p = jnp.pad(pos_rows, ((0, pad), (0, 0)))

    grid_spec = pltpu.PrefetchScalarGridSpec(
        num_scalar_prefetch=1,                 # token ids -> SMEM
        grid=(B, n_tiles),
        in_specs=[
            pl.BlockSpec(memory_space=pl.ANY),                                # word table in HBM
            pl.BlockSpec((1, tile_s, 1), lambda b, s, ids: (b, s, 0)),        # segment ids (VMEM)
            pl.BlockSpec((tile_s, D), lambda b, s, ids: (s, 0)),              # pos rows (seq-tiled)
            pl.BlockSpec((G, D), lambda b, s, ids: (0, 0)),                   # seg table (resident)
            pl.BlockSpec((1, D), lambda b, s, ids: (0, 0)),                   # gamma (resident)
            pl.BlockSpec((1, D), lambda b, s, ids: (0, 0)),                   # beta  (resident)
        ],
        out_specs=pl.BlockSpec((1, tile_s, D), lambda b, s, ids: (b, s, 0)),
        scratch_shapes=[
            pltpu.VMEM((tile_s, D), word_tbl.dtype),     # gathered word rows
            pltpu.SemaphoreType.DMA((tile_s,)),          # one sem per row DMA
        ],
    )

    out = pl.pallas_call(
        bert_embeddings_kernel,
        out_shape=jax.ShapeDtypeStruct((B, S_pad, D), jnp.float32),
        grid_spec=grid_spec,
        compiler_params=pltpu.CompilerParams(
            dimension_semantics=("parallel", "parallel"),
            vmem_limit_bytes=32 * 1024 * 1024,
        ),
    )(ids_p, word_tbl, seg_p, pos_p, seg_tbl, gamma, beta)

    return out[:, :S, :]


def init_params(key, vocab_size, embedding_dim, max_seq_len, num_segments, pad_idx):
    k_w, k_p, k_s = jax.random.split(key, 3)
    word_tbl = jax.random.normal(k_w, (vocab_size, embedding_dim), jnp.float32)
    word_tbl = word_tbl.at[pad_idx].set(0.0)   # nn.Embedding zeros padding_idx row at init
    pos_tbl = jax.random.normal(k_p, (max_seq_len, embedding_dim), jnp.float32)
    seg_tbl = jax.random.normal(k_s, (num_segments, embedding_dim), jnp.float32)
    gamma = jnp.ones((1, embedding_dim), jnp.float32)   # nn.LayerNorm default weight
    beta = jnp.zeros((1, embedding_dim), jnp.float32)   # nn.LayerNorm default bias
    return {'word_table': word_tbl, 'pos_table': pos_tbl,
            'seg_table': seg_tbl, 'gamma': gamma, 'beta': beta}


if __name__ == "__main__":
    # Small config: vocab=64, hidden=32, max_seq=16, segments=2, pad=0
    VOCAB, DIM, MAX_SEQ, NSEG, PAD = 64, 32, 16, 2, 0
    B, S = 2, 8

    key = jax.random.PRNGKey(0)
    k_params, k_ids, k_seg = jax.random.split(key, 3)
    params = init_params(k_params, VOCAB, DIM, MAX_SEQ, NSEG, PAD)
    input_ids = jax.random.randint(k_ids, (B, S), 0, VOCAB, dtype=jnp.int32)
    segment_ids = jax.random.randint(k_seg, (B, S), 0, NSEG, dtype=jnp.int32)

    out = bert_embeddings(input_ids, params, segment_ids=segment_ids)
    jax.block_until_ready(out)

    # Pure-JAX reference (embedding gather + sum + LayerNorm, eval-mode dropout).
    ref = (params['word_table'][input_ids]
           + params['pos_table'][jnp.arange(S)][None, :, :]
           + params['seg_table'][segment_ids])
    mu = ref.mean(-1, keepdims=True)
    var = ((ref - mu) ** 2).mean(-1, keepdims=True)
    ref = (ref - mu) / jnp.sqrt(var + 1e-5) * params['gamma'][None] + params['beta'][None]

    assert out.shape == (B, S, DIM)
    assert jnp.max(jnp.abs(out - ref)) < 1e-4

    print("KERNEL_OK")
</pallas_src>

<mosaic_0001>
module attributes {stable_mosaic.version = 11 : i64} {
  func.func @bert_embeddings_kernel(%arg0: i32, %arg1: i32, %arg2: memref<2x8xi32, #tpu.memory_space<smem>>, %arg3: memref<64x32xf32, #tpu.memory_space<any>>, %arg4: memref<1x8x1xi32, #tpu.memory_space<vmem>>, %arg5: memref<8x32xf32, #tpu.memory_space<vmem>>, %arg6: memref<2x32xf32, #tpu.memory_space<vmem>>, %arg7: memref<1x32xf32, #tpu.memory_space<vmem>>, %arg8: memref<1x32xf32, #tpu.memory_space<vmem>>, %arg9: memref<1x8x32xf32, #tpu.memory_space<vmem>>, %arg10: memref<8x32xf32, #tpu.memory_space<vmem>>, %arg11: memref<8x!tpu.dma_semaphore, #tpu.memory_space<semaphore_mem>>) attributes {dimension_semantics = [#tpu.dimension_semantics<parallel>, #tpu.dimension_semantics<parallel>], iteration_bounds = array<i64: 2, 1>, scalar_prefetch = 1 : i64, scratch_operands = 2 : i64, tpu.core_type = #tpu.core_type<tc>, window_params = [{}, {transform_indices = @transform_1, window_bounds = array<i64: 1, 8, 1>}, {transform_indices = @transform_2, window_bounds = array<i64: 8, 32>}, {pipeline_mode = #tpu.pipeline_mode<synchronous>, transform_indices = @transform_3, window_bounds = array<i64: 2, 32>}, {pipeline_mode = #tpu.pipeline_mode<synchronous>, transform_indices = @transform_4, window_bounds = array<i64: 1, 32>}, {pipeline_mode = #tpu.pipeline_mode<synchronous>, transform_indices = @transform_5, window_bounds = array<i64: 1, 32>}, {transform_indices = @transform_6, window_bounds = array<i64: 1, 8, 32>}]} {
    %c8_i32 = arith.constant 8 : i32
    %0 = arith.muli %arg1, %c8_i32 : i32
    %c0_i32 = arith.constant 0 : i32
    %1 = arith.addi %0, %c0_i32 : i32
    %2 = arith.index_cast %arg0 : i32 to index
    %3 = arith.index_cast %1 : i32 to index
    %4 = memref.load %arg2[%2, %3] : memref<2x8xi32, #tpu.memory_space<smem>>
    %c0_i32_0 = arith.constant 0 : i32
    %c0_i32_1 = arith.constant 0 : i32
    %5 = tpu.memref_slice %arg3[%4, %c0_i32_1] : memref<64x32xf32, #tpu.memory_space<any>> -> memref<1x32xf32, #tpu.memory_space<any>>
    %c0_i32_2 = arith.constant 0 : i32
    %c0_i32_3 = arith.constant 0 : i32
    %6 = tpu.memref_slice %arg10[%c0_i32_2, %c0_i32_3] : memref<8x32xf32, #tpu.memory_space<vmem>> -> memref<1x32xf32, #tpu.memory_space<vmem>>
    %7 = tpu.memref_slice %arg11[%c0_i32_0] : memref<8x!tpu.dma_semaphore, #tpu.memory_space<semaphore_mem>> -> memref<1x!tpu.dma_semaphore, #tpu.memory_space<semaphore_mem>>
    %8 = tpu.memref_squeeze %7 : memref<1x!tpu.dma_semaphore, #tpu.memory_space<semaphore_mem>> -> memref<!tpu.dma_semaphore, #tpu.memory_space<semaphore_mem>>
    tpu.enqueue_dma source(%5 : memref<1x32xf32, #tpu.memory_space<any>>) target(%6 : memref<1x32xf32, #tpu.memory_space<vmem>>) target_semaphore(%8 : memref<!tpu.dma_semaphore, #tpu.memory_space<semaphore_mem>>)
    %c1_i32 = arith.constant 1 : i32
    %9 = arith.addi %0, %c1_i32 : i32
    %10 = arith.index_cast %arg0 : i32 to index
    %11 = arith.index_cast %9 : i32 to index
    %12 = memref.load %arg2[%10, %11] : memref<2x8xi32, #tpu.memory_space<smem>>
    %c1_i32_4 = arith.constant 1 : i32
    %c0_i32_5 = arith.constant 0 : i32
    %13 = tpu.memref_slice %arg3[%12, %c0_i32_5] : memref<64x32xf32, #tpu.memory_space<any>> -> memref<1x32xf32, #tpu.memory_space<any>>
    %c1_i32_6 = arith.constant 1 : i32
    %c0_i32_7 = arith.constant 0 : i32
    %14 = tpu.memref_slice %arg10[%c1_i32_6, %c0_i32_7] : memref<8x32xf32, #tpu.memory_space<vmem>> -> memref<1x32xf32, #tpu.memory_space<vmem>>
    %15 = tpu.memref_slice %arg11[%c1_i32_4] : memref<8x!tpu.dma_semaphore, #tpu.memory_space<semaphore_mem>> -> memref<1x!tpu.dma_semaphore, #tpu.memory_space<semaphore_mem>>
    %16 = tpu.memref_squeeze %15 : memref<1x!tpu.dma_semaphore, #tpu.memory_space<semaphore_mem>> -> memref<!tpu.dma_semaphore, #tpu.memory_space<semaphore_mem>>
    tpu.enqueue_dma source(%13 : memref<1x32xf32, #tpu.memory_space<any>>) target(%14 : memref<1x32xf32, #tpu.memory_space<vmem>>) target_semaphore(%16 : memref<!tpu.dma_semaphore, #tpu.memory_space<semaphore_mem>>)
    %c2_i32 = arith.constant 2 : i32
    %17 = arith.addi %0, %c2_i32 : i32
    %18 = arith.index_cast %arg0 : i32 to index
    %19 = arith.index_cast %17 : i32 to index
    %20 = memref.load %arg2[%18, %19] : memref<2x8xi32, #tpu.memory_space<smem>>
    %c2_i32_8 = arith.constant 2 : i32
    %c0_i32_9 = arith.constant 0 : i32
    %21 = tpu.memref_slice %arg3[%20, %c0_i32_9] : memref<64x32xf32, #tpu.memory_space<any>> -> memref<1x32xf32, #tpu.memory_space<any>>
    %c2_i32_10 = arith.constant 2 : i32
    %c0_i32_11 = arith.constant 0 : i32
    %22 = tpu.memref_slice %arg10[%c2_i32_10, %c0_i32_11] : memref<8x32xf32, #tpu.memory_space<vmem>> -> memref<1x32xf32, #tpu.memory_space<vmem>>
    %23 = tpu.memref_slice %arg11[%c2_i32_8] : memref<8x!tpu.dma_semaphore, #tpu.memory_space<semaphore_mem>> -> memref<1x!tpu.dma_semaphore, #tpu.memory_space<semaphore_mem>>
    %24 = tpu.memref_squeeze %23 : memref<1x!tpu.dma_semaphore, #tpu.memory_space<semaphore_mem>> -> memref<!tpu.dma_semaphore, #tpu.memory_space<semaphore_mem>>
    tpu.enqueue_dma source(%21 : memref<1x32xf32, #tpu.memory_space<any>>) target(%22 : memref<1x32xf32, #tpu.memory_space<vmem>>) target_semaphore(%24 : memref<!tpu.dma_semaphore, #tpu.memory_space<semaphore_mem>>)
    %c3_i32 = arith.constant 3 : i32
    %25 = arith.addi %0, %c3_i32 : i32
    %26 = arith.index_cast %arg0 : i32 to index
    %27 = arith.index_cast %25 : i32 to index
    %28 = memref.load %arg2[%26, %27] : memref<2x8xi32, #tpu.memory_space<smem>>
    %c3_i32_12 = arith.constant 3 : i32
    %c0_i32_13 = arith.constant 0 : i32
    %29 = tpu.memref_slice %arg3[%28, %c0_i32_13] : memref<64x32xf32, #tpu.memory_space<any>> -> memref<1x32xf32, #tpu.memory_space<any>>
    %c3_i32_14 = arith.constant 3 : i32
    %c0_i32_15 = arith.constant 0 : i32
    %30 = tpu.memref_slice %arg10[%c3_i32_14, %c0_i32_15] : memref<8x32xf32, #tpu.memory_space<vmem>> -> memref<1x32xf32, #tpu.memory_space<vmem>>
    %31 = tpu.memref_slice %arg11[%c3_i32_12] : memref<8x!tpu.dma_semaphore, #tpu.memory_space<semaphore_mem>> -> memref<1x!tpu.dma_semaphore, #tpu.memory_space<semaphore_mem>>
    %32 = tpu.memref_squeeze %31 : memref<1x!tpu.dma_semaphore, #tpu.memory_space<semaphore_mem>> -> memref<!tpu.dma_semaphore, #tpu.memory_space<semaphore_mem>>
    tpu.enqueue_dma source(%29 : memref<1x32xf32, #tpu.memory_space<any>>) target(%30 : memref<1x32xf32, #tpu.memory_space<vmem>>) target_semaphore(%32 : memref<!tpu.dma_semaphore, #tpu.memory_space<semaphore_mem>>)
    %c4_i32 = arith.constant 4 : i32
    %33 = arith.addi %0, %c4_i32 : i32
    %34 = arith.index_cast %arg0 : i32 to index
    %35 = arith.index_cast %33 : i32 to index
    %36 = memref.load %arg2[%34, %35] : memref<2x8xi32, #tpu.memory_space<smem>>
    %c4_i32_16 = arith.constant 4 : i32
    %c0_i32_17 = arith.constant 0 : i32
    %37 = tpu.memref_slice %arg3[%36, %c0_i32_17] : memref<64x32xf32, #tpu.memory_space<any>> -> memref<1x32xf32, #tpu.memory_space<any>>
    %c4_i32_18 = arith.constant 4 : i32
    %c0_i32_19 = arith.constant 0 : i32
    %38 = tpu.memref_slice %arg10[%c4_i32_18, %c0_i32_19] : memref<8x32xf32, #tpu.memory_space<vmem>> -> memref<1x32xf32, #tpu.memory_space<vmem>>
    %39 = tpu.memref_slice %arg11[%c4_i32_16] : memref<8x!tpu.dma_semaphore, #tpu.memory_space<semaphore_mem>> -> memref<1x!tpu.dma_semaphore, #tpu.memory_space<semaphore_mem>>
    %40 = tpu.memref_squeeze %39 : memref<1x!tpu.dma_semaphore, #tpu.memory_space<semaphore_mem>> -> memref<!tpu.dma_semaphore, #tpu.memory_space<semaphore_mem>>
    tpu.enqueue_dma source(%37 : memref<1x32xf32, #tpu.memory_space<any>>) target(%38 : memref<1x32xf32, #tpu.memory_space<vmem>>) target_semaphore(%40 : memref<!tpu.dma_semaphore, #tpu.memory_space<semaphore_mem>>)
    %c5_i32 = arith.constant 5 : i32
    %41 = arith.addi %0, %c5_i32 : i32
    %42 = arith.index_cast %arg0 : i32 to index
    %43 = arith.index_cast %41 : i32 to index
    %44 = memref.load %arg2[%42, %43] : memref<2x8xi32, #tpu.memory_space<smem>>
    %c5_i32_20 = arith.constant 5 : i32
    %c0_i32_21 = arith.constant 0 : i32
    %45 = tpu.memref_slice %arg3[%44, %c0_i32_21] : memref<64x32xf32, #tpu.memory_space<any>> -> memref<1x32xf32, #tpu.memory_space<any>>
    %c5_i32_22 = arith.constant 5 : i32
    %c0_i32_23 = arith.constant 0 : i32
    %46 = tpu.memref_slice %arg10[%c5_i32_22, %c0_i32_23] : memref<8x32xf32, #tpu.memory_space<vmem>> -> memref<1x32xf32, #tpu.memory_space<vmem>>
    %47 = tpu.memref_slice %arg11[%c5_i32_20] : memref<8x!tpu.dma_semaphore, #tpu.memory_space<semaphore_mem>> -> memref<1x!tpu.dma_semaphore, #tpu.memory_space<semaphore_mem>>
    %48 = tpu.memref_squeeze %47 : memref<1x!tpu.dma_semaphore, #tpu.memory_space<semaphore_mem>> -> memref<!tpu.dma_semaphore, #tpu.memory_space<semaphore_mem>>
    tpu.enqueue_dma source(%45 : memref<1x32xf32, #tpu.memory_space<any>>) target(%46 : memref<1x32xf32, #tpu.memory_space<vmem>>) target_semaphore(%48 : memref<!tpu.dma_semaphore, #tpu.memory_space<semaphore_mem>>)
    %c6_i32 = arith.constant 6 : i32
    %49 = arith.addi %0, %c6_i32 : i32
    %50 = arith.index_cast %arg0 : i32 to index
    %51 = arith.index_cast %49 : i32 to index
    %52 = memref.load %arg2[%50, %51] : memref<2x8xi32, #tpu.memory_space<smem>>
    %c6_i32_24 = arith.constant 6 : i32
    %c0_i32_25 = arith.constant 0 : i32
    %53 = tpu.memref_slice %arg3[%52, %c0_i32_25] : memref<64x32xf32, #tpu.memory_space<any>> -> memref<1x32xf32, #tpu.memory_space<any>>
    %c6_i32_26 = arith.constant 6 : i32
    %c0_i32_27 = arith.constant 0 : i32
    %54 = tpu.memref_slice %arg10[%c6_i32_26, %c0_i32_27] : memref<8x32xf32, #tpu.memory_space<vmem>> -> memref<1x32xf32, #tpu.memory_space<vmem>>
    %55 = tpu.memref_slice %arg11[%c6_i32_24] : memref<8x!tpu.dma_semaphore, #tpu.memory_space<semaphore_mem>> -> memref<1x!tpu.dma_semaphore, #tpu.memory_space<semaphore_mem>>
    %56 = tpu.memref_squeeze %55 : memref<1x!tpu.dma_semaphore, #tpu.memory_space<semaphore_mem>> -> memref<!tpu.dma_semaphore, #tpu.memory_space<semaphore_mem>>
    tpu.enqueue_dma source(%53 : memref<1x32xf32, #tpu.memory_space<any>>) target(%54 : memref<1x32xf32, #tpu.memory_space<vmem>>) target_semaphore(%56 : memref<!tpu.dma_semaphore, #tpu.memory_space<semaphore_mem>>)
    %c7_i32 = arith.constant 7 : i32
    %57 = arith.addi %0, %c7_i32 : i32
    %58 = arith.index_cast %arg0 : i32 to index
    %59 = arith.index_cast %57 : i32 to index
    %60 = memref.load %arg2[%58, %59] : memref<2x8xi32, #tpu.memory_space<smem>>
    %c7_i32_28 = arith.constant 7 : i32
    %c0_i32_29 = arith.constant 0 : i32
    %61 = tpu.memref_slice %arg3[%60, %c0_i32_29] : memref<64x32xf32, #tpu.memory_space<any>> -> memref<1x32xf32, #tpu.memory_space<any>>
    %c7_i32_30 = arith.constant 7 : i32
    %c0_i32_31 = arith.constant 0 : i32
    %62 = tpu.memref_slice %arg10[%c7_i32_30, %c0_i32_31] : memref<8x32xf32, #tpu.memory_space<vmem>> -> memref<1x32xf32, #tpu.memory_space<vmem>>
    %63 = tpu.memref_slice %arg11[%c7_i32_28] : memref<8x!tpu.dma_semaphore, #tpu.memory_space<semaphore_mem>> -> memref<1x!tpu.dma_semaphore, #tpu.memory_space<semaphore_mem>>
    %64 = tpu.memref_squeeze %63 : memref<1x!tpu.dma_semaphore, #tpu.memory_space<semaphore_mem>> -> memref<!tpu.dma_semaphore, #tpu.memory_space<semaphore_mem>>
    tpu.enqueue_dma source(%61 : memref<1x32xf32, #tpu.memory_space<any>>) target(%62 : memref<1x32xf32, #tpu.memory_space<vmem>>) target_semaphore(%64 : memref<!tpu.dma_semaphore, #tpu.memory_space<semaphore_mem>>)
    %c0 = arith.constant 0 : index
    %c0_32 = arith.constant 0 : index
    %65 = vector.load %arg5[%c0, %c0_32] : memref<8x32xf32, #tpu.memory_space<vmem>>, vector<8x32xf32>
    %c0_33 = arith.constant 0 : index
    %c0_34 = arith.constant 0 : index
    %c0_35 = arith.constant 0 : index
    %66 = vector.load %arg4[%c0_33, %c0_34, %c0_35] : memref<1x8x1xi32, #tpu.memory_space<vmem>>, vector<1x8x1xi32>
    %67 = vector.shape_cast %66 : vector<1x8x1xi32> to vector<8x1xi32>
    %c0_36 = arith.constant 0 : index
    %c0_37 = arith.constant 0 : index
    %68 = vector.load %arg6[%c0_36, %c0_37] : memref<2x32xf32, #tpu.memory_space<vmem>>, vector<2x32xf32>
    %cst = arith.constant 0.000000e+00 : f32
    %69 = vector.broadcast %cst : f32 to vector<8x32xf32>
    %c0_i32_38 = arith.constant 0 : i32
    %70 = vector.broadcast %c0_i32_38 : i32 to vector<8x1xi32>
    %71 = arith.cmpi eq, %67, %70 : vector<8x1xi32>
    %72 = arith.extui %71 : vector<8x1xi1> to vector<8x1xi32>
    %73 = arith.sitofp %72 : vector<8x1xi32> to vector<8x1xf32>
    %74 = vector.extract_strided_slice %68 {offsets = [0, 0], sizes = [1, 32], strides = [1, 1]} : vector<2x32xf32> to vector<1x32xf32>
    %75 = vector.broadcast %73 : vector<8x1xf32> to vector<8x32xf32>
    %76 = vector.broadcast %74 : vector<1x32xf32> to vector<8x32xf32>
    %77 = arith.mulf %75, %76 : vector<8x32xf32>
    %78 = arith.addf %69, %77 : vector<8x32xf32>
    %c1_i32_39 = arith.constant 1 : i32
    %79 = vector.broadcast %c1_i32_39 : i32 to vector<8x1xi32>
    %80 = arith.cmpi eq, %67, %79 : vector<8x1xi32>
    %81 = arith.extui %80 : vector<8x1xi1> to vector<8x1xi32>
    %82 = arith.sitofp %81 : vector<8x1xi32> to vector<8x1xf32>
    %83 = vector.extract_strided_slice %68 {offsets = [1, 0], sizes = [1, 32], strides = [1, 1]} : vector<2x32xf32> to vector<1x32xf32>
    %84 = vector.broadcast %82 : vector<8x1xf32> to vector<8x32xf32>
    %85 = vector.broadcast %83 : vector<1x32xf32> to vector<8x32xf32>
    %86 = arith.mulf %84, %85 : vector<8x32xf32>
    %87 = arith.addf %78, %86 : vector<8x32xf32>
    %c0_i32_40 = arith.constant 0 : i32
    %c0_i32_41 = arith.constant 0 : i32
    %88 = tpu.memref_slice %arg3[%4, %c0_i32_41] : memref<64x32xf32, #tpu.memory_space<any>> -> memref<1x32xf32, #tpu.memory_space<any>>
    %c0_i32_42 = arith.constant 0 : i32
    %c0_i32_43 = arith.constant 0 : i32
    %89 = tpu.memref_slice %arg10[%c0_i32_42, %c0_i32_43] : memref<8x32xf32, #tpu.memory_space<vmem>> -> memref<1x32xf32, #tpu.memory_space<vmem>>
    %90 = tpu.memref_slice %arg11[%c0_i32_40] : memref<8x!tpu.dma_semaphore, #tpu.memory_space<semaphore_mem>> -> memref<1x!tpu.dma_semaphore, #tpu.memory_space<semaphore_mem>>
    %91 = tpu.memref_squeeze %90 : memref<1x!tpu.dma_semaphore, #tpu.memory_space<semaphore_mem>> -> memref<!tpu.dma_semaphore, #tpu.memory_space<semaphore_mem>>
    tpu.wait_dma2 semaphore(%91 : memref<!tpu.dma_semaphore, #tpu.memory_space<semaphore_mem>>) src(%88 : memref<1x32xf32, #tpu.memory_space<any>>) dst(%89 : memref<1x32xf32, #tpu.memory_space<vmem>>)
    %c1_i32_44 = arith.constant 1 : i32
    %c0_i32_45 = arith.constant 0 : i32
    %92 = tpu.memref_slice %arg3[%12, %c0_i32_45] : memref<64x32xf32, #tpu.memory_space<any>> -> memref<1x32xf32, #tpu.memory_space<any>>
    %c1_i32_46 = arith.constant 1 : i32
    %c0_i32_47 = arith.constant 0 : i32
    %93 = tpu.memref_slice %arg10[%c1_i32_46, %c0_i32_47] : memref<8x32xf32, #tpu.memory_space<vmem>> -> memref<1x32xf32, #tpu.memory_space<vmem>>
    %94 = tpu.memref_slice %arg11[%c1_i32_44] : memref<8x!tpu.dma_semaphore, #tpu.memory_space<semaphore_mem>> -> memref<1x!tpu.dma_semaphore, #tpu.memory_space<semaphore_mem>>
    %95 = tpu.memref_squeeze %94 : memref<1x!tpu.dma_semaphore, #tpu.memory_space<semaphore_mem>> -> memref<!tpu.dma_semaphore, #tpu.memory_space<semaphore_mem>>
    tpu.wait_dma2 semaphore(%95 : memref<!tpu.dma_semaphore, #tpu.memory_space<semaphore_mem>>) src(%92 : memref<1x32xf32, #tpu.memory_space<any>>) dst(%93 : memref<1x32xf32, #tpu.memory_space<vmem>>)
    %c2_i32_48 = arith.constant 2 : i32
    %c0_i32_49 = arith.constant 0 : i32
    %96 = tpu.memref_slice %arg3[%20, %c0_i32_49] : memref<64x32xf32, #tpu.memory_space<any>> -> memref<1x32xf32, #tpu.memory_space<any>>
    %c2_i32_50 = arith.constant 2 : i32
    %c0_i32_51 = arith.constant 0 : i32
    %97 = tpu.memref_slice %arg10[%c2_i32_50, %c0_i32_51] : memref<8x32xf32, #tpu.memory_space<vmem>> -> memref<1x32xf32, #tpu.memory_space<vmem>>
    %98 = tpu.memref_slice %arg11[%c2_i32_48] : memref<8x!tpu.dma_semaphore, #tpu.memory_space<semaphore_mem>> -> memref<1x!tpu.dma_semaphore, #tpu.memory_space<semaphore_mem>>
    %99 = tpu.memref_squeeze %98 : memref<1x!tpu.dma_semaphore, #tpu.memory_space<semaphore_mem>> -> memref<!tpu.dma_semaphore, #tpu.memory_space<semaphore_mem>>
    tpu.wait_dma2 semaphore(%99 : memref<!tpu.dma_semaphore, #tpu.memory_space<semaphore_mem>>) src(%96 : memref<1x32xf32, #tpu.memory_space<any>>) dst(%97 : memref<1x32xf32, #tpu.memory_space<vmem>>)
    %c3_i32_52 = arith.constant 3 : i32
    %c0_i32_53 = arith.constant 0 : i32
    %100 = tpu.memref_slice %arg3[%28, %c0_i32_53] : memref<64x32xf32, #tpu.memory_space<any>> -> memref<1x32xf32, #tpu.memory_space<any>>
    %c3_i32_54 = arith.constant 3 : i32
    %c0_i32_55 = arith.constant 0 : i32
    %101 = tpu.memref_slice %arg10[%c3_i32_54, %c0_i32_55] : memref<8x32xf32, #tpu.memory_space<vmem>> -> memref<1x32xf32, #tpu.memory_space<vmem>>
    %102 = tpu.memref_slice %arg11[%c3_i32_52] : memref<8x!tpu.dma_semaphore, #tpu.memory_space<semaphore_mem>> -> memref<1x!tpu.dma_semaphore, #tpu.memory_space<semaphore_mem>>
    %103 = tpu.memref_squeeze %102 : memref<1x!tpu.dma_semaphore, #tpu.memory_space<semaphore_mem>> -> memref<!tpu.dma_semaphore, #tpu.memory_space<semaphore_mem>>
    tpu.wait_dma2 semaphore(%103 : memref<!tpu.dma_semaphore, #tpu.memory_space<semaphore_mem>>) src(%100 : memref<1x32xf32, #tpu.memory_space<any>>) dst(%101 : memref<1x32xf32, #tpu.memory_space<vmem>>)
    %c4_i32_56 = arith.constant 4 : i32
    %c0_i32_57 = arith.constant 0 : i32
    %104 = tpu.memref_slice %arg3[%36, %c0_i32_57] : memref<64x32xf32, #tpu.memory_space<any>> -> memref<1x32xf32, #tpu.memory_space<any>>
    %c4_i32_58 = arith.constant 4 : i32
    %c0_i32_59 = arith.constant 0 : i32
    %105 = tpu.memref_slice %arg10[%c4_i32_58, %c0_i32_59] : memref<8x32xf32, #tpu.memory_space<vmem>> -> memref<1x32xf32, #tpu.memory_space<vmem>>
    %106 = tpu.memref_slice %arg11[%c4_i32_56] : memref<8x!tpu.dma_semaphore, #tpu.memory_space<semaphore_mem>> -> memref<1x!tpu.dma_semaphore, #tpu.memory_space<semaphore_mem>>
    %107 = tpu.memref_squeeze %106 : memref<1x!tpu.dma_semaphore, #tpu.memory_space<semaphore_mem>> -> memref<!tpu.dma_semaphore, #tpu.memory_space<semaphore_mem>>
    tpu.wait_dma2 semaphore(%107 : memref<!tpu.dma_semaphore, #tpu.memory_space<semaphore_mem>>) src(%104 : memref<1x32xf32, #tpu.memory_space<any>>) dst(%105 : memref<1x32xf32, #tpu.memory_space<vmem>>)
    %c5_i32_60 = arith.constant 5 : i32
    %c0_i32_61 = arith.constant 0 : i32
    %108 = tpu.memref_slice %arg3[%44, %c0_i32_61] : memref<64x32xf32, #tpu.memory_space<any>> -> memref<1x32xf32, #tpu.memory_space<any>>
    %c5_i32_62 = arith.constant 5 : i32
    %c0_i32_63 = arith.constant 0 : i32
    %109 = tpu.memref_slice %arg10[%c5_i32_62, %c0_i32_63] : memref<8x32xf32, #tpu.memory_space<vmem>> -> memref<1x32xf32, #tpu.memory_space<vmem>>
    %110 = tpu.memref_slice %arg11[%c5_i32_60] : memref<8x!tpu.dma_semaphore, #tpu.memory_space<semaphore_mem>> -> memref<1x!tpu.dma_semaphore, #tpu.memory_space<semaphore_mem>>
    %111 = tpu.memref_squeeze %110 : memref<1x!tpu.dma_semaphore, #tpu.memory_space<semaphore_mem>> -> memref<!tpu.dma_semaphore, #tpu.memory_space<semaphore_mem>>
    tpu.wait_dma2 semaphore(%111 : memref<!tpu.dma_semaphore, #tpu.memory_space<semaphore_mem>>) src(%108 : memref<1x32xf32, #tpu.memory_space<any>>) dst(%109 : memref<1x32xf32, #tpu.memory_space<vmem>>)
    %c6_i32_64 = arith.constant 6 : i32
    %c0_i32_65 = arith.constant 0 : i32
    %112 = tpu.memref_slice %arg3[%52, %c0_i32_65] : memref<64x32xf32, #tpu.memory_space<any>> -> memref<1x32xf32, #tpu.memory_space<any>>
    %c6_i32_66 = arith.constant 6 : i32
    %c0_i32_67 = arith.constant 0 : i32
    %113 = tpu.memref_slice %arg10[%c6_i32_66, %c0_i32_67] : memref<8x32xf32, #tpu.memory_space<vmem>> -> memref<1x32xf32, #tpu.memory_space<vmem>>
    %114 = tpu.memref_slice %arg11[%c6_i32_64] : memref<8x!tpu.dma_semaphore, #tpu.memory_space<semaphore_mem>> -> memref<1x!tpu.dma_semaphore, #tpu.memory_space<semaphore_mem>>
    %115 = tpu.memref_squeeze %114 : memref<1x!tpu.dma_semaphore, #tpu.memory_space<semaphore_mem>> -> memref<!tpu.dma_semaphore, #tpu.memory_space<semaphore_mem>>
    tpu.wait_dma2 semaphore(%115 : memref<!tpu.dma_semaphore, #tpu.memory_space<semaphore_mem>>) src(%112 : memref<1x32xf32, #tpu.memory_space<any>>) dst(%113 : memref<1x32xf32, #tpu.memory_space<vmem>>)
    %c7_i32_68 = arith.constant 7 : i32
    %c0_i32_69 = arith.constant 0 : i32
    %116 = tpu.memref_slice %arg3[%60, %c0_i32_69] : memref<64x32xf32, #tpu.memory_space<any>> -> memref<1x32xf32, #tpu.memory_space<any>>
    %c7_i32_70 = arith.constant 7 : i32
    %c0_i32_71 = arith.constant 0 : i32
    %117 = tpu.memref_slice %arg10[%c7_i32_70, %c0_i32_71] : memref<8x32xf32, #tpu.memory_space<vmem>> -> memref<1x32xf32, #tpu.memory_space<vmem>>
    %118 = tpu.memref_slice %arg11[%c7_i32_68] : memref<8x!tpu.dma_semaphore, #tpu.memory_space<semaphore_mem>> -> memref<1x!tpu.dma_semaphore, #tpu.memory_space<semaphore_mem>>
    %119 = tpu.memref_squeeze %118 : memref<1x!tpu.dma_semaphore, #tpu.memory_space<semaphore_mem>> -> memref<!tpu.dma_semaphore, #tpu.memory_space<semaphore_mem>>
    tpu.wait_dma2 semaphore(%119 : memref<!tpu.dma_semaphore, #tpu.memory_space<semaphore_mem>>) src(%116 : memref<1x32xf32, #tpu.memory_space<any>>) dst(%117 : memref<1x32xf32, #tpu.memory_space<vmem>>)
    %c0_72 = arith.constant 0 : index
    %c0_73 = arith.constant 0 : index
    %120 = vector.load %arg10[%c0_72, %c0_73] : memref<8x32xf32, #tpu.memory_space<vmem>>, vector<8x32xf32>
    %121 = arith.addf %120, %65 : vector<8x32xf32>
    %122 = arith.addf %121, %87 : vector<8x32xf32>
    %cst_74 = arith.constant dense<0.000000e+00> : vector<8xf32>
    %123 = vector.multi_reduction <add>, %122, %cst_74 [1] : vector<8x32xf32> to vector<8xf32>
    %124 = vector.shape_cast %123 : vector<8xf32> to vector<8x1xf32>
    %cst_75 = arith.constant 3.200000e+01 : f32
    %125 = vector.broadcast %cst_75 : f32 to vector<8x1xf32>
    %126 = arith.divf %124, %125 : vector<8x1xf32>
    %127 = vector.broadcast %126 : vector<8x1xf32> to vector<8x32xf32>
    %128 = arith.subf %122, %127 : vector<8x32xf32>
    %129 = arith.mulf %128, %128 : vector<8x32xf32>
    %cst_76 = arith.constant dense<0.000000e+00> : vector<8xf32>
    %130 = vector.multi_reduction <add>, %129, %cst_76 [1] : vector<8x32xf32> to vector<8xf32>
    %131 = vector.shape_cast %130 : vector<8xf32> to vector<8x1xf32>
    %cst_77 = arith.constant 3.200000e+01 : f32
    %132 = vector.broadcast %cst_77 : f32 to vector<8x1xf32>
    %133 = arith.divf %131, %132 : vector<8x1xf32>
    %cst_78 = arith.constant 9.99999974E-6 : f32
    %134 = vector.broadcast %cst_78 : f32 to vector<8x1xf32>
    %135 = arith.addf %133, %134 : vector<8x1xf32>
    %136 = math.rsqrt %135 : vector<8x1xf32>
    %137 = vector.broadcast %136 : vector<8x1xf32> to vector<8x32xf32>
    %138 = arith.mulf %128, %137 : vector<8x32xf32>
    %c0_79 = arith.constant 0 : index
    %c0_80 = arith.constant 0 : index
    %139 = vector.load %arg7[%c0_79, %c0_80] : memref<1x32xf32, #tpu.memory_space<vmem>>, vector<1x32xf32>
    %140 = vector.broadcast %139 : vector<1x32xf32> to vector<8x32xf32>
    %141 = arith.mulf %138, %140 : vector<8x32xf32>
    %c0_81 = arith.constant 0 : index
    %c0_82 = arith.constant 0 : index
    %142 = vector.load %arg8[%c0_81, %c0_82] : memref<1x32xf32, #tpu.memory_space<vmem>>, vector<1x32xf32>
    %143 = vector.broadcast %142 : vector<1x32xf32> to vector<8x32xf32>
    %144 = arith.addf %141, %143 : vector<8x32xf32>
    %145 = vector.shape_cast %144 : vector<8x32xf32> to vector<1x8x32xf32>
    %c0_83 = arith.constant 0 : index
    %c0_84 = arith.constant 0 : index
    %c0_85 = arith.constant 0 : index
    %146 = vector.load %arg9[%c0_83, %c0_84, %c0_85] : memref<1x8x32xf32, #tpu.memory_space<vmem>>, vector<1x8x32xf32>
    tpu.vector_store %arg9[%c0_83, %c0_84, %c0_85], %145 {strides = array<i32>} : memref<1x8x32xf32, #tpu.memory_space<vmem>>, vector<1x8x32xf32>,
    return
  }
  func.func @transform_1(%arg0: i32, %arg1: i32, %arg2: memref<2x8xi32, #tpu.memory_space<smem>>) -> (i32, i32, i32) {
    %c0_i32 = arith.constant 0 : i32
    %c0_i32_0 = arith.constant 0 : i32
    return %arg0, %arg1, %c0_i32 : i32, i32, i32
  }
  func.func @transform_2(%arg0: i32, %arg1: i32, %arg2: memref<2x8xi32, #tpu.memory_space<smem>>) -> (i32, i32) {
    %c0_i32 = arith.constant 0 : i32
    %c0_i32_0 = arith.constant 0 : i32
    return %arg1, %c0_i32 : i32, i32
  }
  func.func @transform_3(%arg0: i32, %arg1: i32, %arg2: memref<2x8xi32, #tpu.memory_space<smem>>) -> (i32, i32) {
    %c0_i32 = arith.constant 0 : i32
    %c0_i32_0 = arith.constant 0 : i32
    %c0_i32_1 = arith.constant 0 : i32
    return %c0_i32, %c0_i32_0 : i32, i32
  }
  func.func @transform_4(%arg0: i32, %arg1: i32, %arg2: memref<2x8xi32, #tpu.memory_space<smem>>) -> (i32, i32) {
    %c0_i32 = arith.constant 0 : i32
    %c0_i32_0 = arith.constant 0 : i32
    %c0_i32_1 = arith.constant 0 : i32
    return %c0_i32, %c0_i32_0 : i32, i32
  }
  func.func @transform_5(%arg0: i32, %arg1: i32, %arg2: memref<2x8xi32, #tpu.memory_space<smem>>) -> (i32, i32) {
    %c0_i32 = arith.constant 0 : i32
    %c0_i32_0 = arith.constant 0 : i32
    %c0_i32_1 = arith.constant 0 : i32
    return %c0_i32, %c0_i32_0 : i32, i32
  }
  func.func @transform_6(%arg0: i32, %arg1: i32, %arg2: memref<2x8xi32, #tpu.memory_space<smem>>) -> (i32, i32, i32) {
    %c0_i32 = arith.constant 0 : i32
    %c0_i32_0 = arith.constant 0 : i32
    return %arg0, %arg1, %c0_i32 : i32, i32, i32
  }
}

</mosaic_0001>

<llo_original>
// kernel: tpu_custom_call.1
$region0: #{tpu_custom_call.1}
  #allocation0 [shape = 'u32[]', space=smem, size = 0x4, offset = 0x4, fixed_abs, tag = 'smem constant byte address 0x4 - core index']
  #allocation1 [shape = 'u32[72,128]{1,0:T(1,128)}', space=vmem, size = 0x9000, scoped, tag = 'internal scratch']
  #allocation2 [shape = 'f32[8,32]{1,0:T(8,128)}', space=vmem, size = 0x1000, scoped, tag = 'scratch operand']
  #allocation3 [shape = 's32[8]{0}', space=sflag, size = 0x20, scoped, tag = 'scratch operand']
  #allocation4 [shape = 's32[1]{0}', space=sflag, size = 0x4, scoped, tag = 'scoped memory for tpu_custom_call.1']
  #allocation5 [shape = 'u8[1024]{0}', space=smem, size = 0x400, scoped, tag = 'prefetched SMEM operand 0']
  #allocation8 [shape = 's32[]', space=sflag, size = 0x4, offset = 0, fixed_abs, tag = 'sflag constant byte address 0x0 - dummy sync flag']
  #allocation9 [shape = 's32[]', space=sflag, size = 0x4, offset = 0, fixed_abs, tag = 'sflag constant byte address 0x0 - dummy sync flag']
  #allocation10 [shape = 's32[]', space=sflag, size = 0x4, offset = 0, fixed_abs, tag = 'sflag constant byte address 0x0 - dummy sync flag']
  #allocation11 [shape = 's32[]', space=sflag, size = 0x4, offset = 0, fixed_abs, tag = 'sflag constant byte address 0x0 - dummy sync flag']
  #allocation12 [shape = 's32[]', space=sflag, size = 0x4, offset = 0, fixed_abs, tag = 'sflag constant byte address 0x0 - dummy sync flag']
  #allocation13 [shape = 's32[]', space=sflag, size = 0x4, offset = 0, fixed_abs, tag = 'sflag constant byte address 0x0 - dummy sync flag']
  #allocation14 [shape = 's32[]', space=sflag, size = 0x4, offset = 0, fixed_abs, tag = 'sflag constant byte address 0x0 - dummy sync flag']
  #allocation15 [shape = 's32[]', space=sflag, size = 0x4, offset = 0, fixed_abs, tag = 'sflag constant byte address 0x0 - dummy sync flag']
  %s0 = inlined_call_operand.vmem [shape: s32[2,8], index: 0, kind: input, shape index: {}]
  %s1 = inlined_call_operand.vmem [shape: f32[64,32], index: 1, kind: input, shape index: {}]
  %s2 = inlined_call_operand.vmem [shape: s32[2,8,1], index: 2, kind: input, shape index: {}]
  %s3 = inlined_call_operand.vmem [shape: f32[8,32], index: 3, kind: input, shape index: {}]
  %s4 = inlined_call_operand.vmem [shape: f32[2,32], index: 4, kind: input, shape index: {}]
  %s5 = inlined_call_operand.vmem [shape: f32[1,32], index: 5, kind: input, shape index: {}]
  %s6 = inlined_call_operand.vmem [shape: f32[1,32], index: 6, kind: input, shape index: {}]
  %s7 = inlined_call_operand.hbm [shape: f32[2,8,32], index: 7, kind: output, shape index: {}]
  %s8 = sld [smem:[#allocation0]]
  $region293: #{tpu_custom_call.1} parent=0
    _
  %s10 = ssub.s32 1, %s8
  %s11 = scalar_select 0, %s10, %s8
  %s13 = sshll.u32 %s0, 4
  %s14 = int_to_ptr.vmem [resolvable:$true] %s13
  %16 = dma.vmem_to_smem %s14, 32, [#allocation5], [#allocation4]
  %18 = dma.done [#allocation4], 32
  %19 = sfence
  $region1: #{tpu_custom_call.1} parent=0
    #allocation6 [shape = 'u8[8192]{0}', space=vmem, size = 0x2000, scoped, tag = 'output window, operand 0']
    #allocation7 [shape = 's32[2]{0}', space=sflag, size = 0x8, scoped, tag = 'scoped memory for tpu_custom_call.1']
    %20 = vsyncpa [#allocation7], 0
    %s21 = scalar_lea.sflag [#allocation7], 1
    %22 = vsyncpa %s21, 0
    loop: start=0, step=1, limit=4
    $region2: #{tpu_custom_call.1} parent=1 // loop_pre_header
      _
    $region3: #{tpu_custom_call.1} parent=1 // loop_header
      %s24 = sphi 0, %s28
      %p25 = scmp.ge.s32.totalorder %s24, 4
      %s31 = sphi 0, %s43
      %s32 = sphi 0, %s39
      %s33 = sphi 0, %s31
      %s34 = sphi 0, %s32
      %s35 = sphi 0, %s33
      %s36 = sphi 0, %s34
      %s48 = sphi 0, %s50
      %s51 = sphi 0, %s48
      %s52 = sphi 0, %s51
      %s68 = sphi 0, %s52
      %s74 = sphi 0, %s76
      %s77 = sphi 0, %s74
      %s78 = sphi 0, %s77
      %s94 = sphi 0, %s78
      %s98 = sphi 0, %s98
      %s100 = sphi 0, %s98
      %s101 = sphi 0, %s100
      %s115 = sphi 0, %s101
      %s119 = sphi 0, %s119
      %s121 = sphi 0, %s119
      %s122 = sphi 0, %s121
      %s136 = sphi 0, %s122
      %s140 = sphi 0, %s140
      %s142 = sphi 0, %s140
      %s143 = sphi 0, %s142
      %s157 = sphi 0, %s143
      %s165 = sphi 0, %s167
      %s168 = sphi 0, %s165
      %s169 = sphi 0, %s168
      %s185 = sphi 0, %s169
    $region4: #{tpu_custom_call.1} parent=1 // loop_header_branch
      %27 = sbr.rel (%p25) target = $region8
    $region5: #{tpu_custom_call.1} parent=1 // loop_body
      %s29 = ssub.s32 %s24, 1
      %s30 = ssub.s32 %s24, 2
      %s37 = sadd.s32 1, %s32
      %p38 = scmp.ge.s32.totalorder %s37, 1
      %s39 = scalar_select %p38, 0, %s37
      %s40 = sadd.s32 1, %s31
      %s41 = scalar_select %p38, %s40, %s31
      %p42 = scmp.ge.s32.totalorder %s41, 2
      %s43 = scalar_select %p42, 0, %s41
      %s44 = ssub.s32 %s31, %s43
      %s45 = ssub.s32 %s32, %s39
      %s46 = sor.u32 %s44, %s45
      %p47 = scmp.eq.s32.totalorder %s46, 0
      %s49 = sadd.s32 %s48, 1
      %s50 = scalar_select %p47, %s48, %s49
      %p53 = pneg %p47
      %p54 = scmp.eq.s32.totalorder %s24, 1
      %p55 = por %p53, %p54
      %p56 = scmp.ne.s32.totalorder %s48, %s51
      %p57 = scmp.eq.s32.totalorder %s24, 0
      %p58 = por %p56, %p57
      %p59 = scmp.ne.s32.totalorder %s48, %s51
      %p60 = scmp.eq.s32.totalorder %s29, 1
      %p61 = por %p59, %p60
      %p62 = scmp.ne.s32.totalorder %s51, %s52
      %p63 = scmp.eq.s32.totalorder %s29, 0
      %p64 = por %p62, %p63
      %p65 = scmp.ne.s32.totalorder %s51, %s52
      %p66 = scmp.eq.s32.totalorder %s30, 1
      %p67 = por %p65, %p66
      %p69 = scmp.ne.s32.totalorder %s52, %s68
      %p70 = scmp.eq.s32.totalorder %s30, 0
      %p71 = por %p69, %p70
      %s72 = ssub.s32 %s32, %s39
      %p73 = scmp.eq.s32.totalorder %s72, 0
      %s75 = sadd.s32 %s74, 1
      %s76 = scalar_select %p73, %s74, %s75
      %p79 = pneg %p73
      %p80 = scmp.eq.s32.totalorder %s24, 1
      %p81 = por %p79, %p80
      %p82 = scmp.ne.s32.totalorder %s74, %s77
      %p83 = scmp.eq.s32.totalorder %s24, 0
      %p84 = por %p82, %p83
      %p85 = scmp.ne.s32.totalorder %s74, %s77
      %p86 = scmp.eq.s32.totalorder %s29, 1
      %p87 = por %p85, %p86
      %p88 = scmp.ne.s32.totalorder %s77, %s78
      %p89 = scmp.eq.s32.totalorder %s29, 0
      %p90 = por %p88, %p89
      %p91 = scmp.ne.s32.totalorder %s77, %s78
      %p92 = scmp.eq.s32.totalorder %s30, 1
      %p93 = por %p91, %p92
      %p95 = scmp.ne.s32.totalorder %s78, %s94
      %p96 = scmp.eq.s32.totalorder %s30, 0
      %p97 = por %p95, %p96
      %s99 = sadd.s32 %s98, 1
      %p102 = scmp.eq.s32.totalorder %s24, 1
      %p103 = scmp.ne.s32.totalorder %s98, %s100
      %p104 = scmp.eq.s32.totalorder %s24, 0
      %p105 = por %p103, %p104
      %p106 = scmp.ne.s32.totalorder %s98, %s100
      %p107 = scmp.eq.s32.totalorder %s29, 1
      %p108 = por %p106, %p107
      %p109 = scmp.ne.s32.totalorder %s100, %s101
      %p110 = scmp.eq.s32.totalorder %s29, 0
      %p111 = por %p109, %p110
      %p112 = scmp.ne.s32.totalorder %s100, %s101
      %p113 = scmp.eq.s32.totalorder %s30, 1
      %p114 = por %p112, %p113
      %p116 = scmp.ne.s32.totalorder %s101, %s115
      %p117 = scmp.eq.s32.totalorder %s30, 0
      %p118 = por %p116, %p117
      %s120 = sadd.s32 %s119, 1
      %p123 = scmp.eq.s32.totalorder %s24, 1
      %p124 = scmp.ne.s32.totalorder %s119, %s121
      %p125 = scmp.eq.s32.totalorder %s24, 0
      %p126 = por %p124, %p125
      %p127 = scmp.ne.s32.totalorder %s119, %s121
      %p128 = scmp.eq.s32.totalorder %s29, 1
      %p129 = por %p127, %p128
      %p130 = scmp.ne.s32.totalorder %s121, %s122
      %p131 = scmp.eq.s32.totalorder %s29, 0
      %p132 = por %p130, %p131
      %p133 = scmp.ne.s32.totalorder %s121, %s122
      %p134 = scmp.eq.s32.totalorder %s30, 1
      %p135 = por %p133, %p134
      %p137 = scmp.ne.s32.totalorder %s122, %s136
      %p138 = scmp.eq.s32.totalorder %s30, 0
      %p139 = por %p137, %p138
      %s141 = sadd.s32 %s140, 1
      %p144 = scmp.eq.s32.totalorder %s24, 1
      %p145 = scmp.ne.s32.totalorder %s140, %s142
      %p146 = scmp.eq.s32.totalorder %s24, 0
      %p147 = por %p145, %p146
      %p148 = scmp.ne.s32.totalorder %s140, %s142
      %p149 = scmp.eq.s32.totalorder %s29, 1
      %p150 = por %p148, %p149
      %p151 = scmp.ne.s32.totalorder %s142, %s143
      %p152 = scmp.eq.s32.totalorder %s29, 0
      %p153 = por %p151, %p152
      %p154 = scmp.ne.s32.totalorder %s142, %s143
      %p155 = scmp.eq.s32.totalorder %s30, 1
      %p156 = por %p154, %p155
      %p158 = scmp.ne.s32.totalorder %s143, %s157
      %p159 = scmp.eq.s32.totalorder %s30, 0
      %p160 = por %p158, %p159
      %s161 = ssub.s32 %s31, %s43
      %s162 = ssub.s32 %s32, %s39
      %s163 = sor.u32 %s161, %s162
      %p164 = scmp.eq.s32.totalorder %s163, 0
      %s166 = sadd.s32 %s165, 1
      %s167 = scalar_select %p164, %s165, %s166
      %p170 = pneg %p164
      %p171 = scmp.eq.s32.totalorder %s24, 1
      %p172 = por %p170, %p171
      %p173 = scmp.ne.s32.totalorder %s165, %s168
      %p174 = scmp.eq.s32.totalorder %s24, 0
      %p175 = por %p173, %p174
      %p176 = scmp.ne.s32.totalorder %s165, %s168
      %p177 = scmp.eq.s32.totalorder %s29, 1
      %p178 = por %p176, %p177
      %p179 = scmp.ne.s32.totalorder %s168, %s169
      %p180 = scmp.eq.s32.totalorder %s29, 0
      %p181 = por %p179, %p180
      %p182 = scmp.ne.s32.totalorder %s168, %s169
      %p183 = scmp.eq.s32.totalorder %s30, 1
      %p184 = por %p182, %p183
      %p186 = scmp.ne.s32.totalorder %s169, %s185
      %p187 = scmp.eq.s32.totalorder %s30, 0
      %p188 = por %p186, %p187
      %p189 = scmp.le.s32.totalorder 1, %s24
      %p190 = scmp.lt.s32.totalorder %s24, 3
      %p191 = pnand %p189, %p190
      %p192 = pneg %p191
      // Predicated region
      $region9: #{tpu_custom_call.1} parent=5 // pred_check
        _
      $region10: #{tpu_custom_call.1} parent=5 // pred_check_branch
        %194 = sbr.rel (%p191) target = $region12
      $region11: #{tpu_custom_call.1} parent=5 // pred_region
        %s195 = ssub.s32 %s24, 1
        // Predicated region
        $region13: #{tpu_custom_call.1} parent=11 // pred_check
          %p196 = pneg %p90
        $region14: #{tpu_custom_call.1} parent=11 // pred_check_branch
          %198 = sbr.rel (%p196) target = $region16
        $region15: #{tpu_custom_call.1} parent=11 // pred_region
          %p199 = scmp.lt.s32.totalorder %s34, 0
          %s200 = scalar_select %p199, %s34, 0
          %s201 = smul.addr %s200, 8
          %s202 = scalar_lea.vmem %s3, %s201
        $region16: #{tpu_custom_call.1} parent=11 // pred_fallthru
          _
        // Predicated region
        $region17: #{tpu_custom_call.1} parent=11 // pred_check
          %p203 = pneg %p111
        $region18: #{tpu_custom_call.1} parent=11 // pred_check_branch
          %205 = sbr.rel (%p203) target = $region20
        $region19: #{tpu_custom_call.1} parent=11 // pred_region
          _
        $region20: #{tpu_custom_call.1} parent=11 // pred_fallthru
          _
        // Predicated region
        $region21: #{tpu_custom_call.1} parent=11 // pred_check
          %p206 = pneg %p132
        $region22: #{tpu_custom_call.1} parent=11 // pred_check_branch
          %208 = sbr.rel (%p206) target = $region24
        $region23: #{tpu_custom_call.1} parent=11 // pred_region
          _
        $region24: #{tpu_custom_call.1} parent=11 // pred_fallthru
          _
        // Predicated region
        $region25: #{tpu_custom_call.1} parent=11 // pred_check
          %p209 = pneg %p153
        $region26: #{tpu_custom_call.1} parent=11 // pred_check_branch
          %211 = sbr.rel (%p209) target = $region28
        $region27: #{tpu_custom_call.1} parent=11 // pred_region
          _
        $region28: #{tpu_custom_call.1} parent=11 // pred_fallthru
          _
      $region12: #{tpu_custom_call.1} parent=5 // pred_fallthru
        _
      %p212 = scmp.lt.s32.totalorder %s24, 2
      // Predicated region
      $region29: #{tpu_custom_call.1} parent=5 // pred_check
        %p213 = pneg %p212
      $region30: #{tpu_custom_call.1} parent=5 // pred_check_branch
        %215 = sbr.rel (%p213) target = $region32
      $region31: #{tpu_custom_call.1} parent=5 // pred_region
        // Predicated region
        $region33: #{tpu_custom_call.1} parent=31 // pred_check
          %p216 = pneg %p58
        $region34: #{tpu_custom_call.1} parent=31 // pred_check_branch
          %218 = sbr.rel (%p216) target = $region36
        $region35: #{tpu_custom_call.1} parent=31 // pred_region
          %p219 = scmp.lt.s32.totalorder %s31, 1
          %s220 = scalar_select %p219, %s31, 1
          %p221 = scmp.lt.s32.totalorder %s32, 0
          %s222 = scalar_select %p221, %s32, 0
          %s223 = sadd.s32 %s222, %s220
          %s224 = smul.addr %s223, 8
          %s225 = scalar_lea.vmem %s2, %s224
        $region36: #{tpu_custom_call.1} parent=31 // pred_fallthru
          _
      $region32: #{tpu_custom_call.1} parent=5 // pred_fallthru
        _
      %p226 = scmp.le.s32.totalorder 1, %s24
      %p227 = scmp.lt.s32.totalorder %s24, 3
      %p228 = pnand %p226, %p227
      %p229 = pneg %p228
      // Predicated region
      $region37: #{tpu_custom_call.1} parent=5 // pred_check
        _
      $region38: #{tpu_custom_call.1} parent=5 // pred_check_branch
        %231 = sbr.rel (%p228) target = $region40
      $region39: #{tpu_custom_call.1} parent=5 // pred_region
        %s232 = ssub.s32 %s24, 1
        %p233 = scmp.lt.s32.totalorder %s33, 1
        %s234 = scalar_select %p233, %s33, 1
        %p235 = scmp.lt.s32.totalorder %s34, 0
        %s236 = scalar_select %p235, %s34, 0
        %s237 = sadd.s32 %s236, %s234
        %s238 = smul.addr %s237, 8
        %s239 = scalar_lea.vmem %s2, %s238
        %p240 = pneg %p64
        %p241 = pneg %p61
        %p242 = scmp.lt.s32.totalorder %s34, 0
        %s243 = scalar_select %p242, %s34, 0
        %s244 = smul.addr %s243, 8
        %s245 = scalar_lea.vmem %s3, %s244
        %p246 = pneg %p90
        %p247 = pneg %p87
        %p248 = pneg %p111
        %p249 = pneg %p108
        %p250 = pneg %p132
        %p251 = pneg %p129
        %p252 = pneg %p153
        %p253 = pneg %p150
        %p254 = pneg %p181
        %p255 = pneg %p178
        %s256 = sand.u32 %s168, 1
        %s257 = scalar_lea.sflag [#allocation7], %s256
        %s258 = sand.u32 %s168, 1
        %s259 = smul.addr %s258, 8
        %s260 = scalar_lea.vmem [#allocation6], %s259
        %p261 = scmp.lt.s32.totalorder %s33, 1
        %s262 = scalar_select %p261, %s33, 1
        %p263 = scmp.lt.s32.totalorder %s34, 0
        %s264 = scalar_select %p263, %s34, 0
        %s265 = sadd.s32 %s264, %s262
        %s266 = smul.addr %s265, 8
        %s267 = scalar_lea.vmem %s2, %s266
        %p268 = scmp.lt.s32.totalorder %s34, 0
        %s269 = scalar_select %p268, %s34, 0
        %s270 = smul.addr %s269, 8
        %s271 = scalar_lea.vmem %s3, %s270
        %s272 = smul.u32 %s34, 8
        %s273 = sshra.s32 %s272, 7
        %s274 = sand.u32 %s272, 127
        %s275 = sadd.s32 %s273, %s33
        %s276 = smul.u32 %s275, 128
        %s277 = sshra.s32 %s272, 7
        %s278 = sand.u32 %s272, 127
        %s279 = sadd.s32 %s276, %s278
        %s280 = sld [smem:[#allocation5 + %s279]]
        %s281 = scalar_lea.vmem %s1, %s280
        // Predicated region
        $region41: #{tpu_custom_call.1} parent=39 // pred_check
          _
        $region42: #{tpu_custom_call.1} parent=39 // pred_check_branch
          %283 = sbr.rel target = $region44
        $region43: #{tpu_custom_call.1} parent=39 // pred_region
          // Predicated region
          $region56: #{tpu_custom_call.1} parent=43 // pred_check
            _
          $region57: #{tpu_custom_call.1} parent=43 // pred_check_branch
            %299 = sbr.rel (0) target = $region59
          $region58: #{tpu_custom_call.1} parent=43 // pred_region
            %s301 = ssub.s32 2, 1
            loop: start=0, step=1, limit=1
            $region60: #{tpu_custom_call.1} parent=58 // loop_pre_header
              _
            $region61: #{tpu_custom_call.1} parent=58 // loop_header
              %s303 = sphi 0, %s307
              %p304 = scmp.ge.s32.totalorder %s303, 1
              %s308 = sphi %s281, %s281
              %s309 = sphi [#allocation2], [#allocation2]
            $region62: #{tpu_custom_call.1} parent=58 // loop_header_branch
              %306 = sbr.rel (%p304) target = $region66
            $region63: #{tpu_custom_call.1} parent=58 // loop_body
              %v310 = vld [vmem:[%s308] sm:%s301]
              %311 = vst [vmem:[%s309] sm:%s301] %v310
            $region64: #{tpu_custom_call.1} parent=58 // loop_footer
              %s307 = sadd.s32 1, %s303
            $region65: #{tpu_custom_call.1} parent=58 // loop_footer_branch
              %302 = sbr.rel target = $region61
            $region66: #{tpu_custom_call.1} parent=58 // loop_exit
              _
          $region59: #{tpu_custom_call.1} parent=43 // pred_fallthru
            _
        $region44: #{tpu_custom_call.1} parent=39 // pred_fallthru
          _
        // Predicated region
        $region45: #{tpu_custom_call.1} parent=39 // pred_check
          _
        $region46: #{tpu_custom_call.1} parent=39 // pred_check_branch
          %285 = sbr.rel (0) target = $region48
        $region47: #{tpu_custom_call.1} parent=39 // pred_region
          %s287 = ssub.s32 2, 1
          loop: start=0, step=1, limit=1
          $region49: #{tpu_custom_call.1} parent=47 // loop_pre_header
            _
          $region50: #{tpu_custom_call.1} parent=47 // loop_header
            %s289 = sphi 0, %s293
            %p290 = scmp.ge.s32.totalorder %s289, 1
            %s294 = sphi %s281, %s281
            %s295 = sphi [#allocation2], [#allocation2]
          $region51: #{tpu_custom_call.1} parent=47 // loop_header_branch
            %292 = sbr.rel (%p290) target = $region55
          $region52: #{tpu_custom_call.1} parent=47 // loop_body
            %v296 = vld [vmem:[%s294] sm:%s287]
            %297 = vst [vmem:[%s295] sm:%s287] %v296
          $region53: #{tpu_custom_call.1} parent=47 // loop_footer
            %s293 = sadd.s32 1, %s289
          $region54: #{tpu_custom_call.1} parent=47 // loop_footer_branch
            %288 = sbr.rel target = $region50
          $region55: #{tpu_custom_call.1} parent=47 // loop_exit
            _
        $region48: #{tpu_custom_call.1} parent=39 // pred_fallthru
          _
        // Predicated region
        $region67: #{tpu_custom_call.1} parent=39 // pred_check
          _
        $region68: #{tpu_custom_call.1} parent=39 // pred_check_branch
          %314 = sbr.rel (0) target = $region70
        $region69: #{tpu_custom_call.1} parent=39 // pred_region
          %315 = vsyncadd [#allocation3], 16
        $region70: #{tpu_custom_call.1} parent=39 // pred_fallthru
          _
        %s316 = sadd.s32 %s272, 1
        %s317 = sshra.s32 %s316, 7
        %s318 = sand.u32 %s316, 127
        %s319 = sadd.s32 %s317, %s33
        %s320 = smul.u32 %s319, 128
        %s321 = sshra.s32 %s316, 7
        %s322 = sand.u32 %s316, 127
        %s323 = sadd.s32 %s320, %s322
        %s324 = sld [smem:[#allocation5 + %s323]]
        %s325 = scalar_lea.vmem %s1, %s324
        %s326 = scalar_lea.vmem [#allocation2], 1
        %s327 = scalar_lea.sflag [#allocation3], 1
        // Predicated region
        $region71: #{tpu_custom_call.1} parent=39 // pred_check
          _
        $region72: #{tpu_custom_call.1} parent=39 // pred_check_branch
          %329 = sbr.rel target = $region74
        $region73: #{tpu_custom_call.1} parent=39 // pred_region
          // Predicated region
          $region86: #{tpu_custom_call.1} parent=73 // pred_check
            _
          $region87: #{tpu_custom_call.1} parent=73 // pred_check_branch
            %345 = sbr.rel (0) target = $region89
          $region88: #{tpu_custom_call.1} parent=73 // pred_region
            %s347 = ssub.s32 2, 1
            loop: start=0, step=1, limit=1
            $region90: #{tpu_custom_call.1} parent=88 // loop_pre_header
              _
            $region91: #{tpu_custom_call.1} parent=88 // loop_header
              %s349 = sphi 0, %s353
              %p350 = scmp.ge.s32.totalorder %s349, 1
              %s354 = sphi %s325, %s325
              %s355 = sphi %s326, %s326
            $region92: #{tpu_custom_call.1} parent=88 // loop_header_branch
              %352 = sbr.rel (%p350) target = $region96
            $region93: #{tpu_custom_call.1} parent=88 // loop_body
              %v356 = vld [vmem:[%s354] sm:%s347]
              %357 = vst [vmem:[%s355] sm:%s347] %v356
            $region94: #{tpu_custom_call.1} parent=88 // loop_footer
              %s353 = sadd.s32 1, %s349
            $region95: #{tpu_custom_call.1} parent=88 // loop_footer_branch
              %348 = sbr.rel target = $region91
            $region96: #{tpu_custom_call.1} parent=88 // loop_exit
              _
          $region89: #{tpu_custom_call.1} parent=73 // pred_fallthru
            _
        $region74: #{tpu_custom_call.1} parent=39 // pred_fallthru
          _
        // Predicated region
        $region75: #{tpu_custom_call.1} parent=39 // pred_check
          _
        $region76: #{tpu_custom_call.1} parent=39 // pred_check_branch
          %331 = sbr.rel (0) target = $region78
        $region77: #{tpu_custom_call.1} parent=39 // pred_region
          %s333 = ssub.s32 2, 1
          loop: start=0, step=1, limit=1
          $region79: #{tpu_custom_call.1} parent=77 // loop_pre_header
            _
          $region80: #{tpu_custom_call.1} parent=77 // loop_header
            %s335 = sphi 0, %s339
            %p336 = scmp.ge.s32.totalorder %s335, 1
            %s340 = sphi %s325, %s325
            %s341 = sphi %s326, %s326
          $region81: #{tpu_custom_call.1} parent=77 // loop_header_branch
            %338 = sbr.rel (%p336) target = $region85
          $region82: #{tpu_custom_call.1} parent=77 // loop_body
            %v342 = vld [vmem:[%s340] sm:%s333]
            %343 = vst [vmem:[%s341] sm:%s333] %v342
          $region83: #{tpu_custom_call.1} parent=77 // loop_footer
            %s339 = sadd.s32 1, %s335
          $region84: #{tpu_custom_call.1} parent=77 // loop_footer_branch
            %334 = sbr.rel target = $region80
          $region85: #{tpu_custom_call.1} parent=77 // loop_exit
            _
        $region78: #{tpu_custom_call.1} parent=39 // pred_fallthru
          _
        // Predicated region
        $region97: #{tpu_custom_call.1} parent=39 // pred_check
          _
        $region98: #{tpu_custom_call.1} parent=39 // pred_check_branch
          %360 = sbr.rel (0) target = $region100
        $region99: #{tpu_custom_call.1} parent=39 // pred_region
          %361 = vsyncadd %s327, 16
        $region100: #{tpu_custom_call.1} parent=39 // pred_fallthru
          _
        %s362 = sadd.s32 %s272, 2
        %s363 = sshra.s32 %s362, 7
        %s364 = sand.u32 %s362, 127
        %s365 = sadd.s32 %s363, %s33
        %s366 = smul.u32 %s365, 128
        %s367 = sshra.s32 %s362, 7
        %s368 = sand.u32 %s362, 127
        %s369 = sadd.s32 %s366, %s368
        %s370 = sld [smem:[#allocation5 + %s369]]
        %s371 = scalar_lea.vmem %s1, %s370
        %s372 = scalar_lea.vmem [#allocation2], 2
        %s373 = scalar_lea.sflag [#allocation3], 2
        // Predicated region
        $region101: #{tpu_custom_call.1} parent=39 // pred_check
          _
        $region102: #{tpu_custom_call.1} parent=39 // pred_check_branch
          %375 = sbr.rel target = $region104
        $region103: #{tpu_custom_call.1} parent=39 // pred_region
          // Predicated region
          $region116: #{tpu_custom_call.1} parent=103 // pred_check
            _
          $region117: #{tpu_custom_call.1} parent=103 // pred_check_branch
            %391 = sbr.rel (0) target = $region119
          $region118: #{tpu_custom_call.1} parent=103 // pred_region
            %s393 = ssub.s32 2, 1
            loop: start=0, step=1, limit=1
            $region120: #{tpu_custom_call.1} parent=118 // loop_pre_header
              _
            $region121: #{tpu_custom_call.1} parent=118 // loop_header
              %s395 = sphi 0, %s399
              %p396 = scmp.ge.s32.totalorder %s395, 1
              %s400 = sphi %s371, %s371
              %s401 = sphi %s372, %s372
            $region122: #{tpu_custom_call.1} parent=118 // loop_header_branch
              %398 = sbr.rel (%p396) target = $region126
            $region123: #{tpu_custom_call.1} parent=118 // loop_body
              %v402 = vld [vmem:[%s400] sm:%s393]
              %403 = vst [vmem:[%s401] sm:%s393] %v402
            $region124: #{tpu_custom_call.1} parent=118 // loop_footer
              %s399 = sadd.s32 1, %s395
            $region125: #{tpu_custom_call.1} parent=118 // loop_footer_branch
              %394 = sbr.rel target = $region121
            $region126: #{tpu_custom_call.1} parent=118 // loop_exit
              _
          $region119: #{tpu_custom_call.1} parent=103 // pred_fallthru
            _
        $region104: #{tpu_custom_call.1} parent=39 // pred_fallthru
          _
        // Predicated region
        $region105: #{tpu_custom_call.1} parent=39 // pred_check
          _
        $region106: #{tpu_custom_call.1} parent=39 // pred_check_branch
          %377 = sbr.rel (0) target = $region108
        $region107: #{tpu_custom_call.1} parent=39 // pred_region
          %s379 = ssub.s32 2, 1
          loop: start=0, step=1, limit=1
          $region109: #{tpu_custom_call.1} parent=107 // loop_pre_header
            _
          $region110: #{tpu_custom_call.1} parent=107 // loop_header
            %s381 = sphi 0, %s385
            %p382 = scmp.ge.s32.totalorder %s381, 1
            %s386 = sphi %s371, %s371
            %s387 = sphi %s372, %s372
          $region111: #{tpu_custom_call.1} parent=107 // loop_header_branch
            %384 = sbr.rel (%p382) target = $region115
          $region112: #{tpu_custom_call.1} parent=107 // loop_body
            %v388 = vld [vmem:[%s386] sm:%s379]
            %389 = vst [vmem:[%s387] sm:%s379] %v388
          $region113: #{tpu_custom_call.1} parent=107 // loop_footer
            %s385 = sadd.s32 1, %s381
          $region114: #{tpu_custom_call.1} parent=107 // loop_footer_branch
            %380 = sbr.rel target = $region110
          $region115: #{tpu_custom_call.1} parent=107 // loop_exit
            _
        $region108: #{tpu_custom_call.1} parent=39 // pred_fallthru
          _
        // Predicated region
        $region127: #{tpu_custom_call.1} parent=39 // pred_check
          _
        $region128: #{tpu_custom_call.1} parent=39 // pred_check_branch
          %406 = sbr.rel (0) target = $region130
        $region129: #{tpu_custom_call.1} parent=39 // pred_region
          %407 = vsyncadd %s373, 16
        $region130: #{tpu_custom_call.1} parent=39 // pred_fallthru
          _
        %s408 = sadd.s32 %s272, 3
        %s409 = sshra.s32 %s408, 7
        %s410 = sand.u32 %s408, 127
        %s411 = sadd.s32 %s409, %s33
        %s412 = smul.u32 %s411, 128
        %s413 = sshra.s32 %s408, 7
        %s414 = sand.u32 %s408, 127
        %s415 = sadd.s32 %s412, %s414
        %s416 = sld [smem:[#allocation5 + %s415]]
        %s417 = scalar_lea.vmem %s1, %s416
        %s418 = scalar_lea.vmem [#allocation2], 3
        %s419 = scalar_lea.sflag [#allocation3], 3
        // Predicated region
        $region131: #{tpu_custom_call.1} parent=39 // pred_check
          _
        $region132: #{tpu_custom_call.1} parent=39 // pred_check_branch
          %421 = sbr.rel target = $region134
        $region133: #{tpu_custom_call.1} parent=39 // pred_region
          // Predicated region
          $region146: #{tpu_custom_call.1} parent=133 // pred_check
            _
          $region147: #{tpu_custom_call.1} parent=133 // pred_check_branch
            %437 = sbr.rel (0) target = $region149
          $region148: #{tpu_custom_call.1} parent=133 // pred_region
            %s439 = ssub.s32 2, 1
            loop: start=0, step=1, limit=1
            $region150: #{tpu_custom_call.1} parent=148 // loop_pre_header
              _
            $region151: #{tpu_custom_call.1} parent=148 // loop_header
              %s441 = sphi 0, %s445
              %p442 = scmp.ge.s32.totalorder %s441, 1
              %s446 = sphi %s417, %s417
              %s447 = sphi %s418, %s418
            $region152: #{tpu_custom_call.1} parent=148 // loop_header_branch
              %444 = sbr.rel (%p442) target = $region156
            $region153: #{tpu_custom_call.1} parent=148 // loop_body
              %v448 = vld [vmem:[%s446] sm:%s439]
              %449 = vst [vmem:[%s447] sm:%s439] %v448
            $region154: #{tpu_custom_call.1} parent=148 // loop_footer
              %s445 = sadd.s32 1, %s441
            $region155: #{tpu_custom_call.1} parent=148 // loop_footer_branch
              %440 = sbr.rel target = $region151
            $region156: #{tpu_custom_call.1} parent=148 // loop_exit
              _
          $region149: #{tpu_custom_call.1} parent=133 // pred_fallthru
            _
        $region134: #{tpu_custom_call.1} parent=39 // pred_fallthru
          _
        // Predicated region
        $region135: #{tpu_custom_call.1} parent=39 // pred_check
          _
        $region136: #{tpu_custom_call.1} parent=39 // pred_check_branch
          %423 = sbr.rel (0) target = $region138
        $region137: #{tpu_custom_call.1} parent=39 // pred_region
          %s425 = ssub.s32 2, 1
          loop: start=0, step=1, limit=1
          $region139: #{tpu_custom_call.1} parent=137 // loop_pre_header
            _
          $region140: #{tpu_custom_call.1} parent=137 // loop_header
            %s427 = sphi 0, %s431
            %p428 = scmp.ge.s32.totalorder %s427, 1
            %s432 = sphi %s417, %s417
            %s433 = sphi %s418, %s418
          $region141: #{tpu_custom_call.1} parent=137 // loop_header_branch
            %430 = sbr.rel (%p428) target = $region145
          $region142: #{tpu_custom_call.1} parent=137 // loop_body
            %v434 = vld [vmem:[%s432] sm:%s425]
            %435 = vst [vmem:[%s433] sm:%s425] %v434
          $region143: #{tpu_custom_call.1} parent=137 // loop_footer
            %s431 = sadd.s32 1, %s427
          $region144: #{tpu_custom_call.1} parent=137 // loop_footer_branch
            %426 = sbr.rel target = $region140
          $region145: #{tpu_custom_call.1} parent=137 // loop_exit
            _
        $region138: #{tpu_custom_call.1} parent=39 // pred_fallthru
          _
        // Predicated region
        $region157: #{tpu_custom_call.1} parent=39 // pred_check
          _
        $region158: #{tpu_custom_call.1} parent=39 // pred_check_branch
          %452 = sbr.rel (0) target = $region160
        $region159: #{tpu_custom_call.1} parent=39 // pred_region
          %453 = vsyncadd %s419, 16
        $region160: #{tpu_custom_call.1} parent=39 // pred_fallthru
          _
        %s454 = sadd.s32 %s272, 4
        %s455 = sshra.s32 %s454, 7
        %s456 = sand.u32 %s454, 127
        %s457 = sadd.s32 %s455, %s33
        %s458 = smul.u32 %s457, 128
        %s459 = sshra.s32 %s454, 7
        %s460 = sand.u32 %s454, 127
        %s461 = sadd.s32 %s458, %s460
        %s462 = sld [smem:[#allocation5 + %s461]]
        %s463 = scalar_lea.vmem %s1, %s462
        %s464 = scalar_lea.vmem [#allocation2], 4
        %s465 = scalar_lea.sflag [#allocation3], 4
        // Predicated region
        $region161: #{tpu_custom_call.1} parent=39 // pred_check
          _
        $region162: #{tpu_custom_call.1} parent=39 // pred_check_branch
          %467 = sbr.rel target = $region164
        $region163: #{tpu_custom_call.1} parent=39 // pred_region
          // Predicated region
          $region176: #{tpu_custom_call.1} parent=163 // pred_check
            _
          $region177: #{tpu_custom_call.1} parent=163 // pred_check_branch
            %483 = sbr.rel (0) target = $region179
          $region178: #{tpu_custom_call.1} parent=163 // pred_region
            %s485 = ssub.s32 2, 1
            loop: start=0, step=1, limit=1
            $region180: #{tpu_custom_call.1} parent=178 // loop_pre_header
              _
            $region181: #{tpu_custom_call.1} parent=178 // loop_header
              %s487 = sphi 0, %s491
              %p488 = scmp.ge.s32.totalorder %s487, 1
              %s492 = sphi %s463, %s463
              %s493 = sphi %s464, %s464
            $region182: #{tpu_custom_call.1} parent=178 // loop_header_branch
              %490 = sbr.rel (%p488) target = $region186
            $region183: #{tpu_custom_call.1} parent=178 // loop_body
              %v494 = vld [vmem:[%s492] sm:%s485]
              %495 = vst [vmem:[%s493] sm:%s485] %v494
            $region184: #{tpu_custom_call.1} parent=178 // loop_footer
              %s491 = sadd.s32 1, %s487
            $region185: #{tpu_custom_call.1} parent=178 // loop_footer_branch
              %486 = sbr.rel target = $region181
            $region186: #{tpu_custom_call.1} parent=178 // loop_exit
              _
          $region179: #{tpu_custom_call.1} parent=163 // pred_fallthru
            _
        $region164: #{tpu_custom_call.1} parent=39 // pred_fallthru
          _
        // Predicated region
        $region165: #{tpu_custom_call.1} parent=39 // pred_check
          _
        $region166: #{tpu_custom_call.1} parent=39 // pred_check_branch
          %469 = sbr.rel (0) target = $region168
        $region167: #{tpu_custom_call.1} parent=39 // pred_region
          %s471 = ssub.s32 2, 1
          loop: start=0, step=1, limit=1
          $region169: #{tpu_custom_call.1} parent=167 // loop_pre_header
            _
          $region170: #{tpu_custom_call.1} parent=167 // loop_header
            %s473 = sphi 0, %s477
            %p474 = scmp.ge.s32.totalorder %s473, 1
            %s478 = sphi %s463, %s463
            %s479 = sphi %s464, %s464
          $region171: #{tpu_custom_call.1} parent=167 // loop_header_branch
            %476 = sbr.rel (%p474) target = $region175
          $region172: #{tpu_custom_call.1} parent=167 // loop_body
            %v480 = vld [vmem:[%s478] sm:%s471]
            %481 = vst [vmem:[%s479] sm:%s471] %v480
          $region173: #{tpu_custom_call.1} parent=167 // loop_footer
            %s477 = sadd.s32 1, %s473
          $region174: #{tpu_custom_call.1} parent=167 // loop_footer_branch
            %472 = sbr.rel target = $region170
          $region175: #{tpu_custom_call.1} parent=167 // loop_exit
            _
        $region168: #{tpu_custom_call.1} parent=39 // pred_fallthru
          _
        // Predicated region
        $region187: #{tpu_custom_call.1} parent=39 // pred_check
          _
        $region188: #{tpu_custom_call.1} parent=39 // pred_check_branch
          %498 = sbr.rel (0) target = $region190
        $region189: #{tpu_custom_call.1} parent=39 // pred_region
          %499 = vsyncadd %s465, 16
        $region190: #{tpu_custom_call.1} parent=39 // pred_fallthru
          _
        %s500 = sadd.s32 %s272, 5
        %s501 = sshra.s32 %s500, 7
        %s502 = sand.u32 %s500, 127
        %s503 = sadd.s32 %s501, %s33
        %s504 = smul.u32 %s503, 128
        %s505 = sshra.s32 %s500, 7
        %s506 = sand.u32 %s500, 127
        %s507 = sadd.s32 %s504, %s506
        %s508 = sld [smem:[#allocation5 + %s507]]
        %s509 = scalar_lea.vmem %s1, %s508
        %s510 = scalar_lea.vmem [#allocation2], 5
        %s511 = scalar_lea.sflag [#allocation3], 5
        // Predicated region
        $region191: #{tpu_custom_call.1} parent=39 // pred_check
          _
        $region192: #{tpu_custom_call.1} parent=39 // pred_check_branch
          %513 = sbr.rel target = $region194
        $region193: #{tpu_custom_call.1} parent=39 // pred_region
          // Predicated region
          $region206: #{tpu_custom_call.1} parent=193 // pred_check
            _
          $region207: #{tpu_custom_call.1} parent=193 // pred_check_branch
            %529 = sbr.rel (0) target = $region209
          $region208: #{tpu_custom_call.1} parent=193 // pred_region
            %s531 = ssub.s32 2, 1
            loop: start=0, step=1, limit=1
            $region210: #{tpu_custom_call.1} parent=208 // loop_pre_header
              _
            $region211: #{tpu_custom_call.1} parent=208 // loop_header
              %s533 = sphi 0, %s537
              %p534 = scmp.ge.s32.totalorder %s533, 1
              %s538 = sphi %s509, %s509
              %s539 = sphi %s510, %s510
            $region212: #{tpu_custom_call.1} parent=208 // loop_header_branch
              %536 = sbr.rel (%p534) target = $region216
            $region213: #{tpu_custom_call.1} parent=208 // loop_body
              %v540 = vld [vmem:[%s538] sm:%s531]
              %541 = vst [vmem:[%s539] sm:%s531] %v540
            $region214: #{tpu_custom_call.1} parent=208 // loop_footer
              %s537 = sadd.s32 1, %s533
            $region215: #{tpu_custom_call.1} parent=208 // loop_footer_branch
              %532 = sbr.rel target = $region211
            $region216: #{tpu_custom_call.1} parent=208 // loop_exit
              _
          $region209: #{tpu_custom_call.1} parent=193 // pred_fallthru
            _
        $region194: #{tpu_custom_call.1} parent=39 // pred_fallthru
          _
        // Predicated region
        $region195: #{tpu_custom_call.1} parent=39 // pred_check
          _
        $region196: #{tpu_custom_call.1} parent=39 // pred_check_branch
          %515 = sbr.rel (0) target = $region198
        $region197: #{tpu_custom_call.1} parent=39 // pred_region
          %s517 = ssub.s32 2, 1
          loop: start=0, step=1, limit=1
          $region199: #{tpu_custom_call.1} parent=197 // loop_pre_header
            _
          $region200: #{tpu_custom_call.1} parent=197 // loop_header
            %s519 = sphi 0, %s523
            %p520 = scmp.ge.s32.totalorder %s519, 1
            %s524 = sphi %s509, %s509
            %s525 = sphi %s510, %s510
          $region201: #{tpu_custom_call.1} parent=197 // loop_header_branch
            %522 = sbr.rel (%p520) target = $region205
          $region202: #{tpu_custom_call.1} parent=197 // loop_body
            %v526 = vld [vmem:[%s524] sm:%s517]
            %527 = vst [vmem:[%s525] sm:%s517] %v526
          $region203: #{tpu_custom_call.1} parent=197 // loop_footer
            %s523 = sadd.s32 1, %s519
          $region204: #{tpu_custom_call.1} parent=197 // loop_footer_branch
            %518 = sbr.rel target = $region200
          $region205: #{tpu_custom_call.1} parent=197 // loop_exit
            _
        $region198: #{tpu_custom_call.1} parent=39 // pred_fallthru
          _
        // Predicated region
        $region217: #{tpu_custom_call.1} parent=39 // pred_check
          _
        $region218: #{tpu_custom_call.1} parent=39 // pred_check_branch
          %544 = sbr.rel (0) target = $region220
        $region219: #{tpu_custom_call.1} parent=39 // pred_region
          %545 = vsyncadd %s511, 16
        $region220: #{tpu_custom_call.1} parent=39 // pred_fallthru
          _
        %s546 = sadd.s32 %s272, 6
        %s547 = sshra.s32 %s546, 7
        %s548 = sand.u32 %s546, 127
        %s549 = sadd.s32 %s547, %s33
        %s550 = smul.u32 %s549, 128
        %s551 = sshra.s32 %s546, 7
        %s552 = sand.u32 %s546, 127
        %s553 = sadd.s32 %s550, %s552
        %s554 = sld [smem:[#allocation5 + %s553]]
        %s555 = scalar_lea.vmem %s1, %s554
        %s556 = scalar_lea.vmem [#allocation2], 6
        %s557 = scalar_lea.sflag [#allocation3], 6
        // Predicated region
        $region221: #{tpu_custom_call.1} parent=39 // pred_check
          _
        $region222: #{tpu_custom_call.1} parent=39 // pred_check_branch
          %559 = sbr.rel target = $region224
        $region223: #{tpu_custom_call.1} parent=39 // pred_region
          // Predicated region
          $region236: #{tpu_custom_call.1} parent=223 // pred_check
            _
          $region237: #{tpu_custom_call.1} parent=223 // pred_check_branch
            %575 = sbr.rel (0) target = $region239
          $region238: #{tpu_custom_call.1} parent=223 // pred_region
            %s577 = ssub.s32 2, 1
            loop: start=0, step=1, limit=1
            $region240: #{tpu_custom_call.1} parent=238 // loop_pre_header
              _
            $region241: #{tpu_custom_call.1} parent=238 // loop_header
              %s579 = sphi 0, %s583
              %p580 = scmp.ge.s32.totalorder %s579, 1
              %s584 = sphi %s555, %s555
              %s585 = sphi %s556, %s556
            $region242: #{tpu_custom_call.1} parent=238 // loop_header_branch
              %582 = sbr.rel (%p580) target = $region246
            $region243: #{tpu_custom_call.1} parent=238 // loop_body
              %v586 = vld [vmem:[%s584] sm:%s577]
              %587 = vst [vmem:[%s585] sm:%s577] %v586
            $region244: #{tpu_custom_call.1} parent=238 // loop_footer
              %s583 = sadd.s32 1, %s579
            $region245: #{tpu_custom_call.1} parent=238 // loop_footer_branch
              %578 = sbr.rel target = $region241
            $region246: #{tpu_custom_call.1} parent=238 // loop_exit
              _
          $region239: #{tpu_custom_call.1} parent=223 // pred_fallthru
            _
        $region224: #{tpu_custom_call.1} parent=39 // pred_fallthru
          _
        // Predicated region
        $region225: #{tpu_custom_call.1} parent=39 // pred_check
          _
        $region226: #{tpu_custom_call.1} parent=39 // pred_check_branch
          %561 = sbr.rel (0) target = $region228
        $region227: #{tpu_custom_call.1} parent=39 // pred_region
          %s563 = ssub.s32 2, 1
          loop: start=0, step=1, limit=1
          $region229: #{tpu_custom_call.1} parent=227 // loop_pre_header
            _
          $region230: #{tpu_custom_call.1} parent=227 // loop_header
            %s565 = sphi 0, %s569
            %p566 = scmp.ge.s32.totalorder %s565, 1
            %s570 = sphi %s555, %s555
            %s571 = sphi %s556, %s556
          $region231: #{tpu_custom_call.1} parent=227 // loop_header_branch
            %568 = sbr.rel (%p566) target = $region235
          $region232: #{tpu_custom_call.1} parent=227 // loop_body
            %v572 = vld [vmem:[%s570] sm:%s563]
            %573 = vst [vmem:[%s571] sm:%s563] %v572
          $region233: #{tpu_custom_call.1} parent=227 // loop_footer
            %s569 = sadd.s32 1, %s565
          $region234: #{tpu_custom_call.1} parent=227 // loop_footer_branch
            %564 = sbr.rel target = $region230
          $region235: #{tpu_custom_call.1} parent=227 // loop_exit
            _
        $region228: #{tpu_custom_call.1} parent=39 // pred_fallthru
          _
        // Predicated region
        $region247: #{tpu_custom_call.1} parent=39 // pred_check
          _
        $region248: #{tpu_custom_call.1} parent=39 // pred_check_branch
          %590 = sbr.rel (0) target = $region250
        $region249: #{tpu_custom_call.1} parent=39 // pred_region
          %591 = vsyncadd %s557, 16
        $region250: #{tpu_custom_call.1} parent=39 // pred_fallthru
          _
        %s592 = sadd.s32 %s272, 7
        %s593 = sshra.s32 %s592, 7
        %s594 = sand.u32 %s592, 127
        %s595 = sadd.s32 %s593, %s33
        %s596 = smul.u32 %s595, 128
        %s597 = sshra.s32 %s592, 7
        %s598 = sand.u32 %s592, 127
        %s599 = sadd.s32 %s596, %s598
        %s600 = sld [smem:[#allocation5 + %s599]]
        %s601 = scalar_lea.vmem %s1, %s600
        %s602 = scalar_lea.vmem [#allocation2], 7
        %s603 = scalar_lea.sflag [#allocation3], 7
        // Predicated region
        $region251: #{tpu_custom_call.1} parent=39 // pred_check
          _
        $region252: #{tpu_custom_call.1} parent=39 // pred_check_branch
          %605 = sbr.rel target = $region254
        $region253: #{tpu_custom_call.1} parent=39 // pred_region
          // Predicated region
          $region266: #{tpu_custom_call.1} parent=253 // pred_check
            _
          $region267: #{tpu_custom_call.1} parent=253 // pred_check_branch
            %621 = sbr.rel (0) target = $region269
          $region268: #{tpu_custom_call.1} parent=253 // pred_region
            %s623 = ssub.s32 2, 1
            loop: start=0, step=1, limit=1
            $region270: #{tpu_custom_call.1} parent=268 // loop_pre_header
              _
            $region271: #{tpu_custom_call.1} parent=268 // loop_header
              %s625 = sphi 0, %s629
              %p626 = scmp.ge.s32.totalorder %s625, 1
              %s630 = sphi %s601, %s601
              %s631 = sphi %s602, %s602
            $region272: #{tpu_custom_call.1} parent=268 // loop_header_branch
              %628 = sbr.rel (%p626) target = $region276
            $region273: #{tpu_custom_call.1} parent=268 // loop_body
              %v632 = vld [vmem:[%s630] sm:%s623]
              %633 = vst [vmem:[%s631] sm:%s623] %v632
            $region274: #{tpu_custom_call.1} parent=268 // loop_footer
              %s629 = sadd.s32 1, %s625
            $region275: #{tpu_custom_call.1} parent=268 // loop_footer_branch
              %624 = sbr.rel target = $region271
            $region276: #{tpu_custom_call.1} parent=268 // loop_exit
              _
          $region269: #{tpu_custom_call.1} parent=253 // pred_fallthru
            _
        $region254: #{tpu_custom_call.1} parent=39 // pred_fallthru
          _
        // Predicated region
        $region255: #{tpu_custom_call.1} parent=39 // pred_check
          _
        $region256: #{tpu_custom_call.1} parent=39 // pred_check_branch
          %607 = sbr.rel (0) target = $region258
        $region257: #{tpu_custom_call.1} parent=39 // pred_region
          %s609 = ssub.s32 2, 1
          loop: start=0, step=1, limit=1
          $region259: #{tpu_custom_call.1} parent=257 // loop_pre_header
            _
          $region260: #{tpu_custom_call.1} parent=257 // loop_header
            %s611 = sphi 0, %s615
            %p612 = scmp.ge.s32.totalorder %s611, 1
            %s616 = sphi %s601, %s601
            %s617 = sphi %s602, %s602
          $region261: #{tpu_custom_call.1} parent=257 // loop_header_branch
            %614 = sbr.rel (%p612) target = $region265
          $region262: #{tpu_custom_call.1} parent=257 // loop_body
            %v618 = vld [vmem:[%s616] sm:%s609]
            %619 = vst [vmem:[%s617] sm:%s609] %v618
          $region263: #{tpu_custom_call.1} parent=257 // loop_footer
            %s615 = sadd.s32 1, %s611
          $region264: #{tpu_custom_call.1} parent=257 // loop_footer_branch
            %610 = sbr.rel target = $region260
          $region265: #{tpu_custom_call.1} parent=257 // loop_exit
            _
        $region258: #{tpu_custom_call.1} parent=39 // pred_fallthru
          _
        // Predicated region
        $region277: #{tpu_custom_call.1} parent=39 // pred_check
          _
        $region278: #{tpu_custom_call.1} parent=39 // pred_check_branch
          %636 = sbr.rel (0) target = $region280
        $region279: #{tpu_custom_call.1} parent=39 // pred_region
          %637 = vsyncadd %s603, 16
        $region280: #{tpu_custom_call.1} parent=39 // pred_fallthru
          _
        %v638 = vld [vmem:[%s271] sm:$0xff]
        %v639 = vld [vmem:[%s267] sm:$0xff]
        %v640 = vld [vmem:[%s4] sm:$0x3]
        %vm641 = vcmp.eq.s32.totalorder %v639, 0
        %v642 = vsel %vm641, 1, 0
        %v643 = vcvt.s32.f32 %v642
        %645 = vset.pattern.permute.xlu0 0
        %646 = vperm.xlu0 %645, %v643
        %v647 = vpop.permute.xlu0 %646
        %v649 = vperm.slane %v640, 0
        %v650 = vmul.f32 %v647, %v649
        %v651 = vadd.f32 %v650, 0.0
        %vm652 = vcmp.eq.s32.totalorder %v639, 1
        %v653 = vsel %vm652, 1, 0
        %v654 = vcvt.s32.f32 %v653
        %656 = vset.pattern.permute.xlu0 0
        %657 = vperm.xlu0 %656, %v654
        %v658 = vpop.permute.xlu0 %657
        %v660 = vperm.slane %v640, 1
        %v661 = vmul.f32 %v658, %v660
        %v662 = vadd.f32 %v651, %v661
        %s663 = smul.u32 1, 1
        %s664 = sshll.u32 %s663, 4
        %665 = dma.done [#allocation3], %s664
        %s666 = sshll.u32 %s663, 4
        %667 = dma.done %s327, %s666
        %s668 = sshll.u32 %s663, 4
        %669 = dma.done %s373, %s668
        %s670 = sshll.u32 %s663, 4
        %671 = dma.done %s419, %s670
        %s672 = sshll.u32 %s663, 4
        %673 = dma.done %s465, %s672
        %s674 = sshll.u32 %s663, 4
        %675 = dma.done %s511, %s674
        %s676 = sshll.u32 %s663, 4
        %677 = dma.done %s557, %s676
        %s678 = sshll.u32 %s663, 4
        %679 = dma.done %s603, %s678
        %v680 = vld [vmem:[#allocation2] sm:$0xff]
        %v681 = vadd.f32 %v680, %v638
        %v682 = vadd.f32 %v681, %v662
        %vm683 = vcmask 261120
        %v684 = vsel %vm683, %v682, 0.0
        %685 = vadd.xlane.f32.xlu0 %v684
        %v686 = vpop.xlane.xlu0 %685
        %v687 = vrcp.pop 32.0
        %v688 = vmul.f32 32.0, %v687
        %v689 = vsub.f32 1.0, %v688
        %v690 = vmul.f32 %v687, %v689
        %v691 = vadd.f32 %v687, %v690
        %vm692 = vweird.f32 %v687
        %v693 = vsel %vm692, %v687, %v691
        %v694 = vmul.f32 %v686, %v693
        %v695 = vsub.f32 %v682, %v694
        %v696 = vmul.f32 %v695, %v695
        %v697 = vsel %vm683, %v696, 0.0
        %698 = vadd.xlane.f32.xlu0 %v697
        %v699 = vpop.xlane.xlu0 %698
        %v700 = vmul.f32 %v699, %v693
        %v701 = vadd.f32 %v700, 1e-05
        %v702 = vrsqrt.pop %v701
        %v703 = vmul.f32 %v702, %v701
        %v704 = vmul.f32 %v703, %v702
        %v705 = vmul.f32 0.5, %v704
        %v706 = vsub.f32 1.5, %v705
        %v707 = vmul.f32 %v702, %v706
        %vm708 = vweird.f32 %v701
        %vm709 = vweird.f32 %v702
        %vm710 = vmor %vm708, %vm709
        %v711 = vsel %vm710, %v702, %v707
        %v712 = vmul.f32 %v695, %v711
        %v713 = vld [vmem:[%s5] sm:$0x1]
        %v715 = vperm.slane %v713, 0
        %v717 = vmul.f32 %v712, %v715
        %v718 = vld [vmem:[%s6] sm:$0x1]
        %v720 = vperm.slane %v718, 0
        %v722 = vadd.f32 %v717, %v720
        %723 = vst.msk [vmem:[%s260] sm:$0xff] %vm683, %v722
        %s724 = sand.u32 %s168, 1
        %s725 = scalar_lea.sflag [#allocation7], %s724
        %s726 = sand.u32 %s168, 1
        %s727 = smul.addr %s726, 8
        %s728 = scalar_lea.vmem [#allocation6], %s727
        // Predicated region
        $region281: #{tpu_custom_call.1} parent=39 // pred_check
          %p729 = pneg %p178
        $region282: #{tpu_custom_call.1} parent=39 // pred_check_branch
          %731 = sbr.rel (%p729) target = $region284
        $region283: #{tpu_custom_call.1} parent=39 // pred_region
          %733 = vsyncadd %s725, 0
          %s734 = sadd.s32 %s34, %s33
          %s735 = smul.addr %s734, 8
          %s736 = scalar_lea.hbm %s7, %s735
          %s738 = sshll.u32 %s728, 4
          %s739 = int_to_ptr.vmem [resolvable:$true] %s738
          %s740 = sshll.u32 %s736, 4
          %s741 = int_to_ptr.hbm [resolvable:$true] %s740
          %743 = dma.vmem_to_hbm [thread:$0]  %s739, 128, %s741, %s725
        $region284: #{tpu_custom_call.1} parent=39 // pred_fallthru
          _
      $region40: #{tpu_custom_call.1} parent=5 // pred_fallthru
        _
      %p744 = scmp.le.s32.totalorder 2, %s24
      // Predicated region
      $region285: #{tpu_custom_call.1} parent=5 // pred_check
        %p745 = pneg %p744
      $region286: #{tpu_custom_call.1} parent=5 // pred_check_branch
        %747 = sbr.rel (%p745) target = $region288
      $region287: #{tpu_custom_call.1} parent=5 // pred_region
        %s748 = ssub.s32 %s24, 2
        // Predicated region
        $region289: #{tpu_custom_call.1} parent=287 // pred_check
          %p749 = pneg %p184
        $region290: #{tpu_custom_call.1} parent=287 // pred_check_branch
          %751 = sbr.rel (%p749) target = $region292
        $region291: #{tpu_custom_call.1} parent=287 // pred_region
          %s752 = sand.u32 %s169, 1
          %s753 = scalar_lea.sflag [#allocation7], %s752
          %s754 = sand.u32 %s169, 1
          %s755 = smul.addr %s754, 8
          %s756 = scalar_lea.vmem [#allocation6], %s755
          %758 = dma.done %s753, 128
        $region292: #{tpu_custom_call.1} parent=287 // pred_fallthru
          _
      $region288: #{tpu_custom_call.1} parent=5 // pred_fallthru
        _
    $region6: #{tpu_custom_call.1} parent=1 // loop_footer
      %s28 = sadd.s32 1, %s24
    $region7: #{tpu_custom_call.1} parent=1 // loop_footer_branch
      %23 = sbr.rel target = $region3
    $region8: #{tpu_custom_call.1} parent=1 // loop_exit
      _
    %759 = vsyncpa [#allocation7], 1
    %s760 = scalar_lea.sflag [#allocation7], 1
    %761 = vsyncpa %s760, 1
  %762 = vsyncmov [#allocation3]
  %s763 = vpop.sfrf %762
  %p764 = scmp.eq.s32.totalorder %s763, 0
  %p765 = pneg %p764
  %767 = shalt.err (%p765)
  %s768 = scalar_lea.sflag [#allocation3], 1
  %769 = vsyncmov %s768
  %s770 = vpop.sfrf %769
  %p771 = scmp.eq.s32.totalorder %s770, 0
  %p772 = pneg %p771
  %774 = shalt.err (%p772)
  %s775 = scalar_lea.sflag [#allocation3], 2
  %776 = vsyncmov %s775
  %s777 = vpop.sfrf %776
  %p778 = scmp.eq.s32.totalorder %s777, 0
  %p779 = pneg %p778
  %781 = shalt.err (%p779)
  %s782 = scalar_lea.sflag [#allocation3], 3
  %783 = vsyncmov %s782
  %s784 = vpop.sfrf %783
  %p785 = scmp.eq.s32.totalorder %s784, 0
  %p786 = pneg %p785
  %788 = shalt.err (%p786)
  %s789 = scalar_lea.sflag [#allocation3], 4
  %790 = vsyncmov %s789
  %s791 = vpop.sfrf %790
  %p792 = scmp.eq.s32.totalorder %s791, 0
  %p793 = pneg %p792
  %795 = shalt.err (%p793)
  %s796 = scalar_lea.sflag [#allocation3], 5
  %797 = vsyncmov %s796
  %s798 = vpop.sfrf %797
  %p799 = scmp.eq.s32.totalorder %s798, 0
  %p800 = pneg %p799
  %802 = shalt.err (%p800)
  %s803 = scalar_lea.sflag [#allocation3], 6
  %804 = vsyncmov %s803
  %s805 = vpop.sfrf %804
  %p806 = scmp.eq.s32.totalorder %s805, 0
  %p807 = pneg %p806
  %809 = shalt.err (%p807)
  %s810 = scalar_lea.sflag [#allocation3], 7
  %811 = vsyncmov %s810
  %s812 = vpop.sfrf %811
  %p813 = scmp.eq.s32.totalorder %s812, 0
  %p814 = pneg %p813
  %816 = shalt.err (%p814)

</llo_original>
